<compile_context>
chip_gen: v7x
topology: tpu7x:2x2x1
jax: 0.10.0
libtpu: 0.0.40
codegen_flags: <defaults>
</compile_context>

<pallas_src>
import functools

import numpy as np
import jax
import jax.numpy as jnp
from jax.experimental import pallas as pl
from jax.experimental.pallas import tpu as pltpu

WINDOW_SIZE = 11
SIGMA = 1.5
C1 = 0.01 ** 2
C2 = 0.03 ** 2


def _gaussian_1d(size, sigma):
    g = np.exp(-((np.arange(size) - size // 2) ** 2) / (2.0 * sigma ** 2))
    return (g / g.sum()).astype(np.float32)


def _band_conv_matrix(length, g):
    """M with (M @ v) == 'same' zero-padded 1-D convolution of v with g."""
    pad = len(g) // 2
    m = np.zeros((length, length), np.float32)
    for i in range(length):
        for k in range(len(g)):
            j = i + k - pad
            if 0 <= j < length:
                m[i, j] = g[k]
    return m


def _sum_11(a):
    """Sum of a 3D array as a (1,1) array (lane reduce then sublane reduce)."""
    b, h, w = a.shape
    a2 = a.reshape(b * h, w)
    s = jnp.sum(a2, axis=1, keepdims=True)   # (b*h, 1)
    return jnp.sum(s, axis=0, keepdims=True)  # (1, 1)


def _ndsr_kernel(gh_ref, gw_ref, x_ref, y_ref, m_ref, out_ref, *, TC, H, W):
    x = x_ref[0]          # (TC, H, W)
    y = y_ref[0]          # (TC, H, W)
    m = m_ref[0]          # (1, H, W)  -> broadcasts over the channel axis
    gh = gh_ref[...]      # (H, H) banded gaussian (left-multiply, sublane axis)
    gw = gw_ref[...]      # (W, W) banded gaussian (right-multiply, lane axis)

    diff = x - y

    # ---- L1 partial sum ------------------------------------------------------
    l1_s = _sum_11(jnp.abs(diff))

    # ---- Huber (delta=1) partial sum on masked tensors -----------------------
    d = m * diff                              # == m*x - m*y, one less full-map mul
    ad = jnp.abs(d)
    hub_s = _sum_11(jnp.where(ad < 1.0, 0.5 * d * d, ad - 0.5))

    # ---- SSIM: separable 11x11 gaussian conv as MXU matmuls ------------------
    # Stack all 5 conv inputs once so both passes are single (batched) matmuls.
    stacked = jnp.concatenate([x, y, x * x, y * y, x * y], axis=0)   # (5TC, H, W)
    b5 = 5 * TC
    # W (lane) pass: (5TC*H, W) @ (W, W)
    t = jnp.dot(stacked.reshape(b5 * H, W), gw,
                preferred_element_type=jnp.float32).reshape(b5, H, W)
    # H (sublane) pass: batched (H, H) @ (H, W)
    ghb = jnp.broadcast_to(gh, (b5, H, H))
    conv = jax.lax.dot_general(
        ghb, t,
        dimension_numbers=(((2,), (1,)), ((0,), (0,))),
        preferred_element_type=jnp.float32)                          # (5TC, H, W)

    mu1 = conv[0 * TC:1 * TC]
    mu2 = conv[1 * TC:2 * TC]
    e_xx = conv[2 * TC:3 * TC]
    e_yy = conv[3 * TC:4 * TC]
    e_xy = conv[4 * TC:5 * TC]

    mu1_sq = mu1 * mu1
    mu2_sq = mu2 * mu2
    mu12 = mu1 * mu2
    ssim_map = ((2.0 * mu12 + C1) * (2.0 * (e_xy - mu12) + C2)) / (
        (mu1_sq + mu2_sq + C1) * ((e_xx - mu1_sq) + (e_yy - mu2_sq) + C2))
    ssim_s = _sum_11(ssim_map)

    # ---- Pack the three partial sums into a lane-dense (8,128) output tile ---
    r = jax.lax.broadcasted_iota(jnp.int32, (8, 128), 0)
    c = jax.lax.broadcasted_iota(jnp.int32, (8, 128), 1)
    tile = (jnp.where((r == 0) & (c == 0), 1.0, 0.0) * l1_s
            + jnp.where((r == 0) & (c == 1), 1.0, 0.0) * ssim_s
            + jnp.where((r == 0) & (c == 2), 1.0, 0.0) * hub_s)
    out_ref[...] = tile.reshape(1, 1, 8, 128)


def _bilinear_up2x(m):
    """Matches F.interpolate(scale_factor=2, mode='bilinear', align_corners=False)
    for NCHW inputs. (JAX glue, not the hot path.)"""
    n, c, h, w = m.shape

    def idx_w(n_in):
        i = jnp.arange(2 * n_in, dtype=jnp.float32)
        src = jnp.maximum((i + 0.5) / 2.0 - 0.5, 0.0)
        i0 = jnp.minimum(jnp.floor(src).astype(jnp.int32), n_in - 1)
        i1 = jnp.minimum(i0 + 1, n_in - 1)
        lam = src - i0.astype(jnp.float32)
        return i0, i1, lam

    r0, r1, rl = idx_w(h)
    c0, c1, cl = idx_w(w)
    a = (jnp.take(m, r0, axis=2) * (1.0 - rl)[None, None, :, None]
         + jnp.take(m, r1, axis=2) * rl[None, None, :, None])
    b = (jnp.take(a, c0, axis=3) * (1.0 - cl)[None, None, None, :]
         + jnp.take(a, c1, axis=3) * cl[None, None, None, :])
    return b


def _pick_tc(c, h, w, budget_bytes=8 << 20):
    """Largest divisor of C whose per-block VMEM footprint (double-buffered
    inputs + stacked conv intermediates + SSIM temps) stays well under the
    scoped-VMEM budget on every TPU generation (incl. v7x's 64 MiB)."""
    per_chan = 26 * h * w * 4   # ~ (2*2 dbl-buffered x/y + 3*5 stacked + 6 temps) f32
    tc = int(max(1, min(c, budget_bytes // max(per_chan, 1))))
    while c % tc:
        tc -= 1
    return tc


@jax.jit
def ndsr_loss(x, y, mask_prev):
    n, c, h, w = x.shape
    x32 = x.astype(jnp.float32)
    y32 = y.astype(jnp.float32)
    mask_up = _bilinear_up2x(mask_prev.astype(jnp.float32))          # (N, 1, H, W)

    g = _gaussian_1d(WINDOW_SIZE, SIGMA)
    gh = jnp.asarray(_band_conv_matrix(h, g))                        # (H, H)
    gw = jnp.asarray(_band_conv_matrix(w, g).T)                      # (W, W)

    tc = _pick_tc(c, h, w)
    cb = c // tc

    kernel = functools.partial(_ndsr_kernel, TC=tc, H=h, W=w)
    parts = pl.pallas_call(
        kernel,
        grid=(n, cb),
        out_shape=jax.ShapeDtypeStruct((n, cb, 8, 128), jnp.float32),
        in_specs=[
            pl.BlockSpec((h, h), lambda i, j: (0, 0)),               # gaussian (H)
            pl.BlockSpec((w, w), lambda i, j: (0, 0)),               # gaussian (W)
            pl.BlockSpec((1, tc, h, w), lambda i, j: (i, j, 0, 0)),  # x block
            pl.BlockSpec((1, tc, h, w), lambda i, j: (i, j, 0, 0)),  # y block
            pl.BlockSpec((1, 1, h, w), lambda i, j: (i, 0, 0, 0)),   # mask (per-N)
        ],
        out_specs=pl.BlockSpec((1, 1, 8, 128), lambda i, j: (i, j, 0, 0)),
        compiler_params=pltpu.CompilerParams(
            dimension_semantics=("parallel", "parallel"),
            vmem_limit_bytes=48 * 1024 * 1024),
    )(gh, gw, x32, y32, mask_up)

    denom = jnp.float32(n * c * h * w)
    l1 = jnp.sum(parts[:, :, 0, 0]) / denom
    ssim = jnp.sum(parts[:, :, 0, 1]) / denom
    huber = jnp.sum(parts[:, :, 0, 2]) / denom
    return l1 + (1.0 - ssim) + huber


if __name__ == "__main__":
    key = jax.random.PRNGKey(0)
    k1, k2, k3 = jax.random.split(key, 3)
    x = jax.random.uniform(k1, (2, 4, 16, 16), dtype=jnp.float32)          # SR
    y = jax.random.uniform(k2, (2, 4, 16, 16), dtype=jnp.float32)          # HR
    mask_prev = jax.random.uniform(k3, (2, 1, 8, 8), dtype=jnp.float32)    # low-res mask

    loss = ndsr_loss(x, y, mask_prev)
    jax.block_until_ready(loss)
    print("KERNEL_OK")
</pallas_src>

<mosaic_0001>
module attributes {stable_mosaic.version = 11 : i64} {
  func.func @_ndsr_kernel(%arg0: i32, %arg1: i32, %arg2: memref<16x16xf32, #tpu.memory_space<vmem>>, %arg3: memref<16x16xf32, #tpu.memory_space<vmem>>, %arg4: memref<1x4x16x16xf32, #tpu.memory_space<vmem>>, %arg5: memref<1x4x16x16xf32, #tpu.memory_space<vmem>>, %arg6: memref<1x1x16x16xf32, #tpu.memory_space<vmem>>, %arg7: memref<1x1x8x128xf32, #tpu.memory_space<vmem>>) attributes {dimension_semantics = [#tpu.dimension_semantics<parallel>, #tpu.dimension_semantics<parallel>], iteration_bounds = array<i64: 2, 1>, scalar_prefetch = 0 : i64, scratch_operands = 0 : i64, tpu.core_type = #tpu.core_type<tc>, window_params = [{pipeline_mode = #tpu.pipeline_mode<synchronous>, transform_indices = @transform_0, window_bounds = array<i64: 16, 16>}, {pipeline_mode = #tpu.pipeline_mode<synchronous>, transform_indices = @transform_1, window_bounds = array<i64: 16, 16>}, {transform_indices = @transform_2, window_bounds = array<i64: 1, 4, 16, 16>}, {transform_indices = @transform_3, window_bounds = array<i64: 1, 4, 16, 16>}, {transform_indices = @transform_4, window_bounds = array<i64: 1, 1, 16, 16>}, {transform_indices = @transform_5, window_bounds = array<i64: 1, 1, 8, 128>}]} {
    %c0 = arith.constant 0 : index
    %c0_0 = arith.constant 0 : index
    %c0_1 = arith.constant 0 : index
    %c0_2 = arith.constant 0 : index
    %0 = vector.load %arg4[%c0, %c0_0, %c0_1, %c0_2] : memref<1x4x16x16xf32, #tpu.memory_space<vmem>>, vector<1x4x16x16xf32>
    %1 = vector.shape_cast %0 : vector<1x4x16x16xf32> to vector<4x16x16xf32>
    %c0_3 = arith.constant 0 : index
    %c0_4 = arith.constant 0 : index
    %c0_5 = arith.constant 0 : index
    %c0_6 = arith.constant 0 : index
    %2 = vector.load %arg5[%c0_3, %c0_4, %c0_5, %c0_6] : memref<1x4x16x16xf32, #tpu.memory_space<vmem>>, vector<1x4x16x16xf32>
    %3 = vector.shape_cast %2 : vector<1x4x16x16xf32> to vector<4x16x16xf32>
    %c0_7 = arith.constant 0 : index
    %c0_8 = arith.constant 0 : index
    %c0_9 = arith.constant 0 : index
    %c0_10 = arith.constant 0 : index
    %4 = vector.load %arg6[%c0_7, %c0_8, %c0_9, %c0_10] : memref<1x1x16x16xf32, #tpu.memory_space<vmem>>, vector<1x1x16x16xf32>
    %5 = vector.shape_cast %4 : vector<1x1x16x16xf32> to vector<1x16x16xf32>
    %c0_11 = arith.constant 0 : index
    %c0_12 = arith.constant 0 : index
    %6 = vector.load %arg2[%c0_11, %c0_12] : memref<16x16xf32, #tpu.memory_space<vmem>>, vector<16x16xf32>
    %c0_13 = arith.constant 0 : index
    %c0_14 = arith.constant 0 : index
    %7 = vector.load %arg3[%c0_13, %c0_14] : memref<16x16xf32, #tpu.memory_space<vmem>>, vector<16x16xf32>
    %8 = arith.subf %1, %3 : vector<4x16x16xf32>
    %9 = math.absf %8 : vector<4x16x16xf32>
    %10 = vector.shape_cast %9 : vector<4x16x16xf32> to vector<64x16xf32>
    %cst = arith.constant dense<0.000000e+00> : vector<64xf32>
    %11 = vector.multi_reduction <add>, %10, %cst [1] : vector<64x16xf32> to vector<64xf32>
    %12 = vector.shape_cast %11 : vector<64xf32> to vector<64x1xf32>
    %cst_15 = arith.constant dense<0.000000e+00> : vector<1xf32>
    %13 = vector.multi_reduction <add>, %12, %cst_15 [0] : vector<64x1xf32> to vector<1xf32>
    %14 = vector.shape_cast %13 : vector<1xf32> to vector<1x1xf32>
    %15 = vector.broadcast %5 : vector<1x16x16xf32> to vector<4x16x16xf32>
    %16 = arith.mulf %15, %8 : vector<4x16x16xf32>
    %17 = math.absf %16 : vector<4x16x16xf32>
    %cst_16 = arith.constant 1.000000e+00 : f32
    %18 = vector.broadcast %cst_16 : f32 to vector<4x16x16xf32>
    %19 = arith.cmpf olt, %17, %18 : vector<4x16x16xf32>
    %cst_17 = arith.constant 5.000000e-01 : f32
    %20 = vector.broadcast %cst_17 : f32 to vector<4x16x16xf32>
    %21 = arith.mulf %20, %16 : vector<4x16x16xf32>
    %22 = arith.mulf %21, %16 : vector<4x16x16xf32>
    %cst_18 = arith.constant 5.000000e-01 : f32
    %23 = vector.broadcast %cst_18 : f32 to vector<4x16x16xf32>
    %24 = arith.subf %17, %23 : vector<4x16x16xf32>
    %25 = arith.select %19, %22, %24 : vector<4x16x16xi1>, vector<4x16x16xf32>
    %26 = vector.shape_cast %25 : vector<4x16x16xf32> to vector<64x16xf32>
    %cst_19 = arith.constant dense<0.000000e+00> : vector<64xf32>
    %27 = vector.multi_reduction <add>, %26, %cst_19 [1] : vector<64x16xf32> to vector<64xf32>
    %28 = vector.shape_cast %27 : vector<64xf32> to vector<64x1xf32>
    %cst_20 = arith.constant dense<0.000000e+00> : vector<1xf32>
    %29 = vector.multi_reduction <add>, %28, %cst_20 [0] : vector<64x1xf32> to vector<1xf32>
    %30 = vector.shape_cast %29 : vector<1xf32> to vector<1x1xf32>
    %31 = arith.mulf %1, %1 : vector<4x16x16xf32>
    %32 = arith.mulf %3, %3 : vector<4x16x16xf32>
    %33 = arith.mulf %1, %3 : vector<4x16x16xf32>
    %34 = tpu.concatenate %1, %3, %31, %32, %33 in 0 : vector<4x16x16xf32>, vector<4x16x16xf32>, vector<4x16x16xf32>, vector<4x16x16xf32>, vector<4x16x16xf32> -> vector<20x16x16xf32>
    %35 = vector.shape_cast %34 : vector<20x16x16xf32> to vector<320x16xf32>
    %cst_21 = arith.constant dense<0.000000e+00> : vector<320x16xf32>
    %36 = tpu.matmul %35, %7, %cst_21 {dimension_numbers = #tpu.dot_dimension_numbers<[1], [0], [0], [1], [0, 0, 1, 1], [], []>} : vector<320x16xf32>, vector<16x16xf32>, vector<320x16xf32> -> vector<320x16xf32>
    %37 = vector.shape_cast %36 : vector<320x16xf32> to vector<20x16x16xf32>
    %38 = vector.shape_cast %6 : vector<16x16xf32> to vector<1x16x16xf32>
    %39 = vector.broadcast %38 : vector<1x16x16xf32> to vector<20x16x16xf32>
    %cst_22 = arith.constant dense<0.000000e+00> : vector<20x16x16xf32>
    %40 = tpu.matmul %39, %37, %cst_22 {dimension_numbers = #tpu.dot_dimension_numbers<[2], [1], [1], [2], [0, 0, 0, 1, 1, 2], [0], [0]>} : vector<20x16x16xf32>, vector<20x16x16xf32>, vector<20x16x16xf32> -> vector<20x16x16xf32>
    %41 = vector.extract_strided_slice %40 {offsets = [0, 0, 0], sizes = [4, 16, 16], strides = [1, 1, 1]} : vector<20x16x16xf32> to vector<4x16x16xf32>
    %42 = vector.extract_strided_slice %40 {offsets = [4, 0, 0], sizes = [4, 16, 16], strides = [1, 1, 1]} : vector<20x16x16xf32> to vector<4x16x16xf32>
    %43 = vector.extract_strided_slice %40 {offsets = [8, 0, 0], sizes = [4, 16, 16], strides = [1, 1, 1]} : vector<20x16x16xf32> to vector<4x16x16xf32>
    %44 = vector.extract_strided_slice %40 {offsets = [12, 0, 0], sizes = [4, 16, 16], strides = [1, 1, 1]} : vector<20x16x16xf32> to vector<4x16x16xf32>
    %45 = vector.extract_strided_slice %40 {offsets = [16, 0, 0], sizes = [4, 16, 16], strides = [1, 1, 1]} : vector<20x16x16xf32> to vector<4x16x16xf32>
    %46 = arith.mulf %41, %41 : vector<4x16x16xf32>
    %47 = arith.mulf %42, %42 : vector<4x16x16xf32>
    %48 = arith.mulf %41, %42 : vector<4x16x16xf32>
    %cst_23 = arith.constant 2.000000e+00 : f32
    %49 = vector.broadcast %cst_23 : f32 to vector<4x16x16xf32>
    %50 = arith.mulf %49, %48 : vector<4x16x16xf32>
    %cst_24 = arith.constant 9.99999974E-5 : f32
    %51 = vector.broadcast %cst_24 : f32 to vector<4x16x16xf32>
    %52 = arith.addf %50, %51 : vector<4x16x16xf32>
    %53 = arith.subf %45, %48 : vector<4x16x16xf32>
    %cst_25 = arith.constant 2.000000e+00 : f32
    %54 = vector.broadcast %cst_25 : f32 to vector<4x16x16xf32>
    %55 = arith.mulf %54, %53 : vector<4x16x16xf32>
    %cst_26 = arith.constant 8.99999984E-4 : f32
    %56 = vector.broadcast %cst_26 : f32 to vector<4x16x16xf32>
    %57 = arith.addf %55, %56 : vector<4x16x16xf32>
    %58 = arith.mulf %52, %57 : vector<4x16x16xf32>
    %59 = arith.addf %46, %47 : vector<4x16x16xf32>
    %cst_27 = arith.constant 9.99999974E-5 : f32
    %60 = vector.broadcast %cst_27 : f32 to vector<4x16x16xf32>
    %61 = arith.addf %59, %60 : vector<4x16x16xf32>
    %62 = arith.subf %43, %46 : vector<4x16x16xf32>
    %63 = arith.subf %44, %47 : vector<4x16x16xf32>
    %64 = arith.addf %62, %63 : vector<4x16x16xf32>
    %cst_28 = arith.constant 8.99999984E-4 : f32
    %65 = vector.broadcast %cst_28 : f32 to vector<4x16x16xf32>
    %66 = arith.addf %64, %65 : vector<4x16x16xf32>
    %67 = arith.mulf %61, %66 : vector<4x16x16xf32>
    %68 = arith.divf %58, %67 : vector<4x16x16xf32>
    %69 = vector.shape_cast %68 : vector<4x16x16xf32> to vector<64x16xf32>
    %cst_29 = arith.constant dense<0.000000e+00> : vector<64xf32>
    %70 = vector.multi_reduction <add>, %69, %cst_29 [1] : vector<64x16xf32> to vector<64xf32>
    %71 = vector.shape_cast %70 : vector<64xf32> to vector<64x1xf32>
    %cst_30 = arith.constant dense<0.000000e+00> : vector<1xf32>
    %72 = vector.multi_reduction <add>, %71, %cst_30 [0] : vector<64x1xf32> to vector<1xf32>
    %73 = vector.shape_cast %72 : vector<1xf32> to vector<1x1xf32>
    %74 = tpu.iota {dimensions = array<i32: 0>} : vector<8x128xi32>
    %75 = tpu.iota {dimensions = array<i32: 1>} : vector<8x128xi32>
    %c0_i32 = arith.constant 0 : i32
    %76 = vector.broadcast %c0_i32 : i32 to vector<8x128xi32>
    %77 = arith.cmpi eq, %74, %76 : vector<8x128xi32>
    %c0_i32_31 = arith.constant 0 : i32
    %78 = vector.broadcast %c0_i32_31 : i32 to vector<8x128xi32>
    %79 = arith.cmpi eq, %75, %78 : vector<8x128xi32>
    %80 = arith.andi %77, %79 : vector<8x128xi1>
    %cst_32 = arith.constant 1.000000e+00 : f32
    %cst_33 = arith.constant 0.000000e+00 : f32
    %81 = vector.broadcast %cst_32 : f32 to vector<8x128xf32>
    %82 = vector.broadcast %cst_33 : f32 to vector<8x128xf32>
    %83 = arith.select %80, %81, %82 : vector<8x128xi1>, vector<8x128xf32>
    %84 = vector.broadcast %14 : vector<1x1xf32> to vector<8x128xf32>
    %85 = arith.mulf %83, %84 : vector<8x128xf32>
    %c0_i32_34 = arith.constant 0 : i32
    %86 = vector.broadcast %c0_i32_34 : i32 to vector<8x128xi32>
    %87 = arith.cmpi eq, %74, %86 : vector<8x128xi32>
    %c1_i32 = arith.constant 1 : i32
    %88 = vector.broadcast %c1_i32 : i32 to vector<8x128xi32>
    %89 = arith.cmpi eq, %75, %88 : vector<8x128xi32>
    %90 = arith.andi %87, %89 : vector<8x128xi1>
    %cst_35 = arith.constant 1.000000e+00 : f32
    %cst_36 = arith.constant 0.000000e+00 : f32
    %91 = vector.broadcast %cst_35 : f32 to vector<8x128xf32>
    %92 = vector.broadcast %cst_36 : f32 to vector<8x128xf32>
    %93 = arith.select %90, %91, %92 : vector<8x128xi1>, vector<8x128xf32>
    %94 = vector.broadcast %73 : vector<1x1xf32> to vector<8x128xf32>
    %95 = arith.mulf %93, %94 : vector<8x128xf32>
    %96 = arith.addf %85, %95 : vector<8x128xf32>
    %c0_i32_37 = arith.constant 0 : i32
    %97 = vector.broadcast %c0_i32_37 : i32 to vector<8x128xi32>
    %98 = arith.cmpi eq, %74, %97 : vector<8x128xi32>
    %c2_i32 = arith.constant 2 : i32
    %99 = vector.broadcast %c2_i32 : i32 to vector<8x128xi32>
    %100 = arith.cmpi eq, %75, %99 : vector<8x128xi32>
    %101 = arith.andi %98, %100 : vector<8x128xi1>
    %cst_38 = arith.constant 1.000000e+00 : f32
    %cst_39 = arith.constant 0.000000e+00 : f32
    %102 = vector.broadcast %cst_38 : f32 to vector<8x128xf32>
    %103 = vector.broadcast %cst_39 : f32 to vector<8x128xf32>
    %104 = arith.select %101, %102, %103 : vector<8x128xi1>, vector<8x128xf32>
    %105 = vector.broadcast %30 : vector<1x1xf32> to vector<8x128xf32>
    %106 = arith.mulf %104, %105 : vector<8x128xf32>
    %107 = arith.addf %96, %106 : vector<8x128xf32>
    %108 = vector.shape_cast %107 : vector<8x128xf32> to vector<1x1x8x128xf32>
    %c0_40 = arith.constant 0 : index
    %c0_41 = arith.constant 0 : index
    %c0_42 = arith.constant 0 : index
    %c0_43 = arith.constant 0 : index
    %109 = vector.load %arg7[%c0_40, %c0_41, %c0_42, %c0_43] : memref<1x1x8x128xf32, #tpu.memory_space<vmem>>, vector<1x1x8x128xf32>
    tpu.vector_store %arg7[%c0_40, %c0_41, %c0_42, %c0_43], %108 {strides = array<i32>} : memref<1x1x8x128xf32, #tpu.memory_space<vmem>>, vector<1x1x8x128xf32>,
    return
  }
  func.func @transform_0(%arg0: i32, %arg1: i32) -> (i32, i32) {
    %c0_i32 = arith.constant 0 : i32
    %c0_i32_0 = arith.constant 0 : i32
    %c0_i32_1 = arith.constant 0 : i32
    return %c0_i32, %c0_i32_0 : i32, i32
  }
  func.func @transform_1(%arg0: i32, %arg1: i32) -> (i32, i32) {
    %c0_i32 = arith.constant 0 : i32
    %c0_i32_0 = arith.constant 0 : i32
    %c0_i32_1 = arith.constant 0 : i32
    return %c0_i32, %c0_i32_0 : i32, i32
  }
  func.func @transform_2(%arg0: i32, %arg1: i32) -> (i32, i32, i32, i32) {
    %c0_i32 = arith.constant 0 : i32
    %c0_i32_0 = arith.constant 0 : i32
    %c0_i32_1 = arith.constant 0 : i32
    return %arg0, %arg1, %c0_i32, %c0_i32_0 : i32, i32, i32, i32
  }
  func.func @transform_3(%arg0: i32, %arg1: i32) -> (i32, i32, i32, i32) {
    %c0_i32 = arith.constant 0 : i32
    %c0_i32_0 = arith.constant 0 : i32
    %c0_i32_1 = arith.constant 0 : i32
    return %arg0, %arg1, %c0_i32, %c0_i32_0 : i32, i32, i32, i32
  }
  func.func @transform_4(%arg0: i32, %arg1: i32) -> (i32, i32, i32, i32) {
    %c0_i32 = arith.constant 0 : i32
    %c0_i32_0 = arith.constant 0 : i32
    %c0_i32_1 = arith.constant 0 : i32
    %c0_i32_2 = arith.constant 0 : i32
    return %arg0, %c0_i32, %c0_i32_0, %c0_i32_1 : i32, i32, i32, i32
  }
  func.func @transform_5(%arg0: i32, %arg1: i32) -> (i32, i32, i32, i32) {
    %c0_i32 = arith.constant 0 : i32
    %c0_i32_0 = arith.constant 0 : i32
    %c0_i32_1 = arith.constant 0 : i32
    return %arg0, %arg1, %c0_i32, %c0_i32_0 : i32, i32, i32, i32
  }
}

</mosaic_0001>

<llo_original>
// kernel: ndsr_loss.1
$region0: #{ndsr_loss.1}
  #allocation0 [shape = 'u32[]', space=smem, size = 0x4, offset = 0x4, fixed_abs, tag = 'smem constant byte address 0x4 - core index']
  #allocation1 [shape = 'u32[144,128]{1,0:T(1,128)}', space=vmem, size = 0x12000, scoped, tag = 'internal scratch']
  %s0 = inlined_call_operand.vmem [shape: f32[16,16], index: 0, kind: input, shape index: {}, may-alias: {0,1}]
  %s1 = inlined_call_operand.vmem [shape: f32[16,16], index: 1, kind: input, shape index: {}, may-alias: {0,1}]
  %s2 = inlined_call_operand.vmem [shape: f32[2,4,16,16], index: 2, kind: input, shape index: {}]
  %s3 = inlined_call_operand.vmem [shape: f32[2,4,16,16], index: 3, kind: input, shape index: {}]
  %s4 = inlined_call_operand.vmem [shape: f32[2,1,16,16], index: 4, kind: input, shape index: {}]
  %s5 = inlined_call_operand.vmem [shape: f32[2,1,8,128], index: 5, kind: output, shape index: {}]
  %s6 = sld [smem:[#allocation0]]
  $region53: #{ndsr_loss.1} parent=0
    _
  %s8 = ssub.s32 1, %s6
  %s9 = scalar_select 0, %s8, %s6
  loop: start=0, step=1, limit=4
  $region2: #{ndsr_loss.1} parent=0 // loop_pre_header
    _
  $region3: #{ndsr_loss.1} parent=0 // loop_header
    %s11 = sphi 0, %s15
    %p12 = scmp.ge.s32.totalorder %s11, 4
    %s18 = sphi 0, %s30
    %s19 = sphi 0, %s26
    %s20 = sphi 0, %s18
    %s21 = sphi 0, %s19
    %s22 = sphi 0, %s20
    %s23 = sphi 0, %s21
    %s31 = sphi 0, %s31
    %s33 = sphi 0, %s31
    %s34 = sphi 0, %s33
    %s48 = sphi 0, %s34
    %s52 = sphi 0, %s52
    %s54 = sphi 0, %s52
    %s55 = sphi 0, %s54
    %s69 = sphi 0, %s55
    %s77 = sphi 0, %s79
    %s80 = sphi 0, %s77
    %s81 = sphi 0, %s80
    %s97 = sphi 0, %s81
    %s105 = sphi 0, %s107
    %s108 = sphi 0, %s105
    %s109 = sphi 0, %s108
    %s125 = sphi 0, %s109
    %s131 = sphi 0, %s133
    %s134 = sphi 0, %s131
    %s135 = sphi 0, %s134
    %s151 = sphi 0, %s135
    %s159 = sphi 0, %s161
    %s162 = sphi 0, %s159
    %s163 = sphi 0, %s162
    %s179 = sphi 0, %s163
  $region4: #{ndsr_loss.1} parent=0 // loop_header_branch
    %14 = sbr.rel (%p12) target = $region8
  $region5: #{ndsr_loss.1} parent=0 // loop_body
    %s16 = ssub.s32 %s11, 1
    %s17 = ssub.s32 %s11, 2
    %s24 = sadd.s32 1, %s19
    %p25 = scmp.ge.s32.totalorder %s24, 1
    %s26 = scalar_select %p25, 0, %s24
    %s27 = sadd.s32 1, %s18
    %s28 = scalar_select %p25, %s27, %s18
    %p29 = scmp.ge.s32.totalorder %s28, 2
    %s30 = scalar_select %p29, 0, %s28
    %s32 = sadd.s32 %s31, 1
    %p35 = scmp.eq.s32.totalorder %s11, 1
    %p36 = scmp.ne.s32.totalorder %s31, %s33
    %p37 = scmp.eq.s32.totalorder %s11, 0
    %p38 = por %p36, %p37
    %p39 = scmp.ne.s32.totalorder %s31, %s33
    %p40 = scmp.eq.s32.totalorder %s16, 1
    %p41 = por %p39, %p40
    %p42 = scmp.ne.s32.totalorder %s33, %s34
    %p43 = scmp.eq.s32.totalorder %s16, 0
    %p44 = por %p42, %p43
    %p45 = scmp.ne.s32.totalorder %s33, %s34
    %p46 = scmp.eq.s32.totalorder %s17, 1
    %p47 = por %p45, %p46
    %p49 = scmp.ne.s32.totalorder %s34, %s48
    %p50 = scmp.eq.s32.totalorder %s17, 0
    %p51 = por %p49, %p50
    %s53 = sadd.s32 %s52, 1
    %p56 = scmp.eq.s32.totalorder %s11, 1
    %p57 = scmp.ne.s32.totalorder %s52, %s54
    %p58 = scmp.eq.s32.totalorder %s11, 0
    %p59 = por %p57, %p58
    %p60 = scmp.ne.s32.totalorder %s52, %s54
    %p61 = scmp.eq.s32.totalorder %s16, 1
    %p62 = por %p60, %p61
    %p63 = scmp.ne.s32.totalorder %s54, %s55
    %p64 = scmp.eq.s32.totalorder %s16, 0
    %p65 = por %p63, %p64
    %p66 = scmp.ne.s32.totalorder %s54, %s55
    %p67 = scmp.eq.s32.totalorder %s17, 1
    %p68 = por %p66, %p67
    %p70 = scmp.ne.s32.totalorder %s55, %s69
    %p71 = scmp.eq.s32.totalorder %s17, 0
    %p72 = por %p70, %p71
    %s73 = ssub.s32 %s18, %s30
    %s74 = ssub.s32 %s19, %s26
    %s75 = sor.u32 %s73, %s74
    %p76 = scmp.eq.s32.totalorder %s75, 0
    %s78 = sadd.s32 %s77, 1
    %s79 = scalar_select %p76, %s77, %s78
    %p82 = pneg %p76
    %p83 = scmp.eq.s32.totalorder %s11, 1
    %p84 = por %p82, %p83
    %p85 = scmp.ne.s32.totalorder %s77, %s80
    %p86 = scmp.eq.s32.totalorder %s11, 0
    %p87 = por %p85, %p86
    %p88 = scmp.ne.s32.totalorder %s77, %s80
    %p89 = scmp.eq.s32.totalorder %s16, 1
    %p90 = por %p88, %p89
    %p91 = scmp.ne.s32.totalorder %s80, %s81
    %p92 = scmp.eq.s32.totalorder %s16, 0
    %p93 = por %p91, %p92
    %p94 = scmp.ne.s32.totalorder %s80, %s81
    %p95 = scmp.eq.s32.totalorder %s17, 1
    %p96 = por %p94, %p95
    %p98 = scmp.ne.s32.totalorder %s81, %s97
    %p99 = scmp.eq.s32.totalorder %s17, 0
    %p100 = por %p98, %p99
    %s101 = ssub.s32 %s18, %s30
    %s102 = ssub.s32 %s19, %s26
    %s103 = sor.u32 %s101, %s102
    %p104 = scmp.eq.s32.totalorder %s103, 0
    %s106 = sadd.s32 %s105, 1
    %s107 = scalar_select %p104, %s105, %s106
    %p110 = pneg %p104
    %p111 = scmp.eq.s32.totalorder %s11, 1
    %p112 = por %p110, %p111
    %p113 = scmp.ne.s32.totalorder %s105, %s108
    %p114 = scmp.eq.s32.totalorder %s11, 0
    %p115 = por %p113, %p114
    %p116 = scmp.ne.s32.totalorder %s105, %s108
    %p117 = scmp.eq.s32.totalorder %s16, 1
    %p118 = por %p116, %p117
    %p119 = scmp.ne.s32.totalorder %s108, %s109
    %p120 = scmp.eq.s32.totalorder %s16, 0
    %p121 = por %p119, %p120
    %p122 = scmp.ne.s32.totalorder %s108, %s109
    %p123 = scmp.eq.s32.totalorder %s17, 1
    %p124 = por %p122, %p123
    %p126 = scmp.ne.s32.totalorder %s109, %s125
    %p127 = scmp.eq.s32.totalorder %s17, 0
    %p128 = por %p126, %p127
    %s129 = ssub.s32 %s18, %s30
    %p130 = scmp.eq.s32.totalorder %s129, 0
    %s132 = sadd.s32 %s131, 1
    %s133 = scalar_select %p130, %s131, %s132
    %p136 = pneg %p130
    %p137 = scmp.eq.s32.totalorder %s11, 1
    %p138 = por %p136, %p137
    %p139 = scmp.ne.s32.totalorder %s131, %s134
    %p140 = scmp.eq.s32.totalorder %s11, 0
    %p141 = por %p139, %p140
    %p142 = scmp.ne.s32.totalorder %s131, %s134
    %p143 = scmp.eq.s32.totalorder %s16, 1
    %p144 = por %p142, %p143
    %p145 = scmp.ne.s32.totalorder %s134, %s135
    %p146 = scmp.eq.s32.totalorder %s16, 0
    %p147 = por %p145, %p146
    %p148 = scmp.ne.s32.totalorder %s134, %s135
    %p149 = scmp.eq.s32.totalorder %s17, 1
    %p150 = por %p148, %p149
    %p152 = scmp.ne.s32.totalorder %s135, %s151
    %p153 = scmp.eq.s32.totalorder %s17, 0
    %p154 = por %p152, %p153
    %s155 = ssub.s32 %s18, %s30
    %s156 = ssub.s32 %s19, %s26
    %s157 = sor.u32 %s155, %s156
    %p158 = scmp.eq.s32.totalorder %s157, 0
    %s160 = sadd.s32 %s159, 1
    %s161 = scalar_select %p158, %s159, %s160
    %p164 = pneg %p158
    %p165 = scmp.eq.s32.totalorder %s11, 1
    %p166 = por %p164, %p165
    %p167 = scmp.ne.s32.totalorder %s159, %s162
    %p168 = scmp.eq.s32.totalorder %s11, 0
    %p169 = por %p167, %p168
    %p170 = scmp.ne.s32.totalorder %s159, %s162
    %p171 = scmp.eq.s32.totalorder %s16, 1
    %p172 = por %p170, %p171
    %p173 = scmp.ne.s32.totalorder %s162, %s163
    %p174 = scmp.eq.s32.totalorder %s16, 0
    %p175 = por %p173, %p174
    %p176 = scmp.ne.s32.totalorder %s162, %s163
    %p177 = scmp.eq.s32.totalorder %s17, 1
    %p178 = por %p176, %p177
    %p180 = scmp.ne.s32.totalorder %s163, %s179
    %p181 = scmp.eq.s32.totalorder %s17, 0
    %p182 = por %p180, %p181
    %p183 = scmp.le.s32.totalorder 1, %s11
    %p184 = scmp.lt.s32.totalorder %s11, 3
    %p185 = pnand %p183, %p184
    %p186 = pneg %p185
    // Predicated region
    $region9: #{ndsr_loss.1} parent=5 // pred_check
      _
    $region10: #{ndsr_loss.1} parent=5 // pred_check_branch
      %188 = sbr.rel (%p185) target = $region12
    $region11: #{ndsr_loss.1} parent=5 // pred_region
      %s189 = ssub.s32 %s11, 1
      // Predicated region
      $region13: #{ndsr_loss.1} parent=11 // pred_check
        %p190 = pneg %p44
      $region14: #{ndsr_loss.1} parent=11 // pred_check_branch
        %192 = sbr.rel (%p190) target = $region16
      $region15: #{ndsr_loss.1} parent=11 // pred_region
        _
      $region16: #{ndsr_loss.1} parent=11 // pred_fallthru
        _
      // Predicated region
      $region17: #{ndsr_loss.1} parent=11 // pred_check
        %p193 = pneg %p65
      $region18: #{ndsr_loss.1} parent=11 // pred_check_branch
        %195 = sbr.rel (%p193) target = $region20
      $region19: #{ndsr_loss.1} parent=11 // pred_region
        _
      $region20: #{ndsr_loss.1} parent=11 // pred_fallthru
        _
    $region12: #{ndsr_loss.1} parent=5 // pred_fallthru
      _
    %p196 = scmp.lt.s32.totalorder %s11, 2
    // Predicated region
    $region21: #{ndsr_loss.1} parent=5 // pred_check
      %p197 = pneg %p196
    $region22: #{ndsr_loss.1} parent=5 // pred_check_branch
      %199 = sbr.rel (%p197) target = $region24
    $region23: #{ndsr_loss.1} parent=5 // pred_region
      // Predicated region
      $region25: #{ndsr_loss.1} parent=23 // pred_check
        %p200 = pneg %p87
      $region26: #{ndsr_loss.1} parent=23 // pred_check_branch
        %202 = sbr.rel (%p200) target = $region28
      $region27: #{ndsr_loss.1} parent=23 // pred_region
        %s203 = smul.u32 4, %s19
        %p204 = scmp.lt.s32.totalorder %s18, 1
        %s205 = scalar_select %p204, %s18, 1
        %p206 = scmp.lt.s32.totalorder %s203, 3
        %s207 = scalar_select %p206, %s203, 3
        %s208 = smul.addr %s207, 2
        %s209 = smul.addr %s205, 8
        %s210 = sadd.s32 %s208, %s209
        %s211 = smul.addr %s210, 8
        %s212 = scalar_lea.vmem %s2, %s211
        %s213 = smul.u32 4, %s19
      $region28: #{ndsr_loss.1} parent=23 // pred_fallthru
        _
      // Predicated region
      $region29: #{ndsr_loss.1} parent=23 // pred_check
        %p214 = pneg %p115
      $region30: #{ndsr_loss.1} parent=23 // pred_check_branch
        %216 = sbr.rel (%p214) target = $region32
      $region31: #{ndsr_loss.1} parent=23 // pred_region
        %s217 = smul.u32 4, %s19
        %p218 = scmp.lt.s32.totalorder %s18, 1
        %s219 = scalar_select %p218, %s18, 1
        %p220 = scmp.lt.s32.totalorder %s217, 3
        %s221 = scalar_select %p220, %s217, 3
        %s222 = smul.addr %s221, 2
        %s223 = smul.addr %s219, 8
        %s224 = sadd.s32 %s222, %s223
        %s225 = smul.addr %s224, 8
        %s226 = scalar_lea.vmem %s3, %s225
        %s227 = smul.u32 4, %s19
      $region32: #{ndsr_loss.1} parent=23 // pred_fallthru
        _
      // Predicated region
      $region33: #{ndsr_loss.1} parent=23 // pred_check
        %p228 = pneg %p141
      $region34: #{ndsr_loss.1} parent=23 // pred_check_branch
        %230 = sbr.rel (%p228) target = $region36
      $region35: #{ndsr_loss.1} parent=23 // pred_region
        %p231 = scmp.lt.s32.totalorder %s18, 1
        %s232 = scalar_select %p231, %s18, 1
        %s233 = smul.addr %s232, 2
        %s234 = smul.addr %s233, 8
        %s235 = scalar_lea.vmem %s4, %s234
      $region36: #{ndsr_loss.1} parent=23 // pred_fallthru
        _
    $region24: #{ndsr_loss.1} parent=5 // pred_fallthru
      _
    %p236 = scmp.le.s32.totalorder 1, %s11
    %p237 = scmp.lt.s32.totalorder %s11, 3
    %p238 = pnand %p236, %p237
    %p239 = pneg %p238
    // Predicated region
    $region37: #{ndsr_loss.1} parent=5 // pred_check
      _
    $region38: #{ndsr_loss.1} parent=5 // pred_check_branch
      %241 = sbr.rel (%p238) target = $region40
    $region39: #{ndsr_loss.1} parent=5 // pred_region
      %s242 = ssub.s32 %s11, 1
      %p243 = pneg %p44
      %p244 = pneg %p41
      %p245 = pneg %p65
      %p246 = pneg %p62
      %s247 = smul.u32 4, %s21
      %p248 = scmp.lt.s32.totalorder %s20, 1
      %s249 = scalar_select %p248, %s20, 1
      %p250 = scmp.lt.s32.totalorder %s247, 3
      %s251 = scalar_select %p250, %s247, 3
      %s252 = smul.addr %s251, 2
      %s253 = smul.addr %s249, 8
      %s254 = sadd.s32 %s252, %s253
      %s255 = smul.addr %s254, 8
      %s256 = scalar_lea.vmem %s2, %s255
      %p257 = pneg %p93
      %p258 = pneg %p90
      %s259 = smul.u32 4, %s21
      %p260 = scmp.lt.s32.totalorder %s20, 1
      %s261 = scalar_select %p260, %s20, 1
      %p262 = scmp.lt.s32.totalorder %s259, 3
      %s263 = scalar_select %p262, %s259, 3
      %s264 = smul.addr %s263, 2
      %s265 = smul.addr %s261, 8
      %s266 = sadd.s32 %s264, %s265
      %s267 = smul.addr %s266, 8
      %s268 = scalar_lea.vmem %s3, %s267
      %p269 = pneg %p121
      %p270 = pneg %p118
      %p271 = scmp.lt.s32.totalorder %s20, 1
      %s272 = scalar_select %p271, %s20, 1
      %s273 = smul.addr %s272, 2
      %s274 = smul.addr %s273, 8
      %s275 = scalar_lea.vmem %s4, %s274
      %p276 = pneg %p147
      %p277 = pneg %p144
      %p278 = pneg %p175
      %p279 = pneg %p172
      %p280 = scmp.lt.s32.totalorder %s20, 1
      %s281 = scalar_select %p280, %s20, 1
      %p282 = scmp.lt.s32.totalorder %s21, 0
      %s283 = scalar_select %p282, %s21, 0
      %s284 = sadd.s32 %s283, %s281
      %s285 = smul.addr %s284, 8
      %s286 = scalar_lea.vmem %s5, %s285
      %s287 = smul.u32 4, %s21
      %p288 = scmp.lt.s32.totalorder %s20, 1
      %s289 = scalar_select %p288, %s20, 1
      %p290 = scmp.lt.s32.totalorder %s287, 3
      %s291 = scalar_select %p290, %s287, 3
      %s292 = smul.addr %s291, 2
      %s293 = smul.addr %s289, 8
      %s294 = sadd.s32 %s292, %s293
      %s295 = smul.addr %s294, 8
      %s296 = scalar_lea.vmem %s2, %s295
      %s297 = smul.u32 4, %s21
      %s298 = smul.u32 4, %s21
      %p299 = scmp.lt.s32.totalorder %s20, 1
      %s300 = scalar_select %p299, %s20, 1
      %p301 = scmp.lt.s32.totalorder %s298, 3
      %s302 = scalar_select %p301, %s298, 3
      %s303 = smul.addr %s302, 2
      %s304 = smul.addr %s300, 8
      %s305 = sadd.s32 %s303, %s304
      %s306 = smul.addr %s305, 8
      %s307 = scalar_lea.vmem %s3, %s306
      %s308 = smul.u32 4, %s21
      %p309 = scmp.lt.s32.totalorder %s20, 1
      %s310 = scalar_select %p309, %s20, 1
      %s311 = smul.addr %s310, 2
      %s312 = smul.addr %s311, 8
      %s313 = scalar_lea.vmem %s4, %s312
      %p314 = scmp.lt.s32.totalorder %s20, 1
      %s315 = scalar_select %p314, %s20, 1
      %p316 = scmp.lt.s32.totalorder %s21, 0
      %s317 = scalar_select %p316, %s21, 0
      %s318 = sadd.s32 %s317, %s315
      %s319 = smul.addr %s318, 8
      %s320 = scalar_lea.vmem %s5, %s319
      %v321 = vld [vmem:[%s296] sm:$0xff]
      %v322 = vld [vmem:[%s296 + $0x8] sm:$0xff]
      %v323 = vld [vmem:[%s296 + $0x10] sm:$0xff]
      %v324 = vld [vmem:[%s296 + $0x18] sm:$0xff]
      %v325 = vld [vmem:[%s296 + $0x20] sm:$0xff]
      %v326 = vld [vmem:[%s296 + $0x28] sm:$0xff]
      %v327 = vld [vmem:[%s296 + $0x30] sm:$0xff]
      %v328 = vld [vmem:[%s296 + $0x38] sm:$0xff]
      %v329 = vld [vmem:[%s307] sm:$0xff]
      %v330 = vld [vmem:[%s307 + $0x8] sm:$0xff]
      %v331 = vld [vmem:[%s307 + $0x10] sm:$0xff]
      %v332 = vld [vmem:[%s307 + $0x18] sm:$0xff]
      %v333 = vld [vmem:[%s307 + $0x20] sm:$0xff]
      %v334 = vld [vmem:[%s307 + $0x28] sm:$0xff]
      %v335 = vld [vmem:[%s307 + $0x30] sm:$0xff]
      %v336 = vld [vmem:[%s307 + $0x38] sm:$0xff]
      %v337 = vld [vmem:[%s313] sm:$0xff]
      %v338 = vld [vmem:[%s313 + $0x8] sm:$0xff]
      %v339 = vld [vmem:[%s0] sm:$0xff]
      %v340 = vld [vmem:[%s0 + $0x8] sm:$0xff]
      %v341 = vld [vmem:[%s1] sm:$0xff]
      %v342 = vld [vmem:[%s1 + $0x8] sm:$0xff]
      %v343 = vsub.f32 %v321, %v329
      %v344 = vsub.f32 %v322, %v330
      %v345 = vsub.f32 %v323, %v331
      %v346 = vsub.f32 %v324, %v332
      %v347 = vsub.f32 %v325, %v333
      %v348 = vsub.f32 %v326, %v334
      %v349 = vsub.f32 %v327, %v335
      %v350 = vsub.f32 %v328, %v336
      %v351 = vand.u32 2147483647, %v343
      %v352 = vand.u32 2147483647, %v344
      %v353 = vand.u32 2147483647, %v345
      %v354 = vand.u32 2147483647, %v346
      %v355 = vand.u32 2147483647, %v347
      %v356 = vand.u32 2147483647, %v348
      %v357 = vand.u32 2147483647, %v349
      %v358 = vand.u32 2147483647, %v350
      %vm359 = vcmask 130048
      %v360 = vsel %vm359, %v351, 0.0
      %361 = vadd.xlane.f32.xlu0 %v360
      %v362 = vpop.xlane.xlu0 %361
      %v363 = vsel %vm359, %v352, 0.0
      %364 = vadd.xlane.f32.xlu0 %v363
      %v365 = vpop.xlane.xlu0 %364
      %v366 = vsel %vm359, %v353, 0.0
      %367 = vadd.xlane.f32.xlu0 %v366
      %v368 = vpop.xlane.xlu0 %367
      %v369 = vsel %vm359, %v354, 0.0
      %370 = vadd.xlane.f32.xlu0 %v369
      %v371 = vpop.xlane.xlu0 %370
      %v372 = vsel %vm359, %v355, 0.0
      %373 = vadd.xlane.f32.xlu0 %v372
      %v374 = vpop.xlane.xlu0 %373
      %v375 = vsel %vm359, %v356, 0.0
      %376 = vadd.xlane.f32.xlu0 %v375
      %v377 = vpop.xlane.xlu0 %376
      %v378 = vsel %vm359, %v357, 0.0
      %379 = vadd.xlane.f32.xlu0 %v378
      %v380 = vpop.xlane.xlu0 %379
      %v381 = vsel %vm359, %v358, 0.0
      %382 = vadd.xlane.f32.xlu0 %v381
      %v383 = vpop.xlane.xlu0 %382
      %v384 = vadd.f32 %v362, %v365
      %v385 = vadd.f32 %v384, %v368
      %v386 = vadd.f32 %v385, %v371
      %v387 = vadd.f32 %v386, %v374
      %v388 = vadd.f32 %v387, %v377
      %v389 = vadd.f32 %v388, %v380
      %v390 = vadd.f32 %v389, %v383
      %v391 = vrot.slane %v390, 4
      %v392 = vadd.f32 %v390, %v391
      %v393 = vrot.slane %v392, 2
      %v394 = vadd.f32 %v392, %v393
      %v395 = vrot.slane %v394, 1
      %v396 = vadd.f32 %v394, %v395
      %v397 = vmul.f32 %v337, %v343
      %v398 = vmul.f32 %v338, %v344
      %v399 = vmul.f32 %v337, %v345
      %v400 = vmul.f32 %v338, %v346
      %v401 = vmul.f32 %v337, %v347
      %v402 = vmul.f32 %v338, %v348
      %v403 = vmul.f32 %v337, %v349
      %v404 = vmul.f32 %v338, %v350
      %v405 = vand.u32 2147483647, %v397
      %v406 = vand.u32 2147483647, %v398
      %v407 = vand.u32 2147483647, %v399
      %v408 = vand.u32 2147483647, %v400
      %v409 = vand.u32 2147483647, %v401
      %v410 = vand.u32 2147483647, %v402
      %v411 = vand.u32 2147483647, %v403
      %v412 = vand.u32 2147483647, %v404
      %vm413 = vcmp.lt.f32.partialorder %v405, 1.0
      %vm414 = vcmp.lt.f32.partialorder %v406, 1.0
      %vm415 = vcmp.lt.f32.partialorder %v407, 1.0
      %vm416 = vcmp.lt.f32.partialorder %v408, 1.0
      %vm417 = vcmp.lt.f32.partialorder %v409, 1.0
      %vm418 = vcmp.lt.f32.partialorder %v410, 1.0
      %vm419 = vcmp.lt.f32.partialorder %v411, 1.0
      %vm420 = vcmp.lt.f32.partialorder %v412, 1.0
      %v421 = vmul.f32 %v397, 0.5
      %v422 = vmul.f32 %v398, 0.5
      %v423 = vmul.f32 %v399, 0.5
      %v424 = vmul.f32 %v400, 0.5
      %v425 = vmul.f32 %v401, 0.5
      %v426 = vmul.f32 %v402, 0.5
      %v427 = vmul.f32 %v403, 0.5
      %v428 = vmul.f32 %v404, 0.5
      %v429 = vmul.f32 %v421, %v397
      %v430 = vmul.f32 %v422, %v398
      %v431 = vmul.f32 %v423, %v399
      %v432 = vmul.f32 %v424, %v400
      %v433 = vmul.f32 %v425, %v401
      %v434 = vmul.f32 %v426, %v402
      %v435 = vmul.f32 %v427, %v403
      %v436 = vmul.f32 %v428, %v404
      %v437 = vsub.f32 %v405, 0.5
      %v438 = vsub.f32 %v406, 0.5
      %v439 = vsub.f32 %v407, 0.5
      %v440 = vsub.f32 %v408, 0.5
      %v441 = vsub.f32 %v409, 0.5
      %v442 = vsub.f32 %v410, 0.5
      %v443 = vsub.f32 %v411, 0.5
      %v444 = vsub.f32 %v412, 0.5
      %v445 = vsel %vm413, %v429, %v437
      %v446 = vsel %vm414, %v430, %v438
      %v447 = vsel %vm415, %v431, %v439
      %v448 = vsel %vm416, %v432, %v440
      %v449 = vsel %vm417, %v433, %v441
      %v450 = vsel %vm418, %v434, %v442
      %v451 = vsel %vm419, %v435, %v443
      %v452 = vsel %vm420, %v436, %v444
      %v453 = vsel %vm359, %v445, 0.0
      %454 = vadd.xlane.f32.xlu0 %v453
      %v455 = vpop.xlane.xlu0 %454
      %v456 = vsel %vm359, %v446, 0.0
      %457 = vadd.xlane.f32.xlu0 %v456
      %v458 = vpop.xlane.xlu0 %457
      %v459 = vsel %vm359, %v447, 0.0
      %460 = vadd.xlane.f32.xlu0 %v459
      %v461 = vpop.xlane.xlu0 %460
      %v462 = vsel %vm359, %v448, 0.0
      %463 = vadd.xlane.f32.xlu0 %v462
      %v464 = vpop.xlane.xlu0 %463
      %v465 = vsel %vm359, %v449, 0.0
      %466 = vadd.xlane.f32.xlu0 %v465
      %v467 = vpop.xlane.xlu0 %466
      %v468 = vsel %vm359, %v450, 0.0
      %469 = vadd.xlane.f32.xlu0 %v468
      %v470 = vpop.xlane.xlu0 %469
      %v471 = vsel %vm359, %v451, 0.0
      %472 = vadd.xlane.f32.xlu0 %v471
      %v473 = vpop.xlane.xlu0 %472
      %v474 = vsel %vm359, %v452, 0.0
      %475 = vadd.xlane.f32.xlu0 %v474
      %v476 = vpop.xlane.xlu0 %475
      %v477 = vadd.f32 %v455, %v458
      %v478 = vadd.f32 %v477, %v461
      %v479 = vadd.f32 %v478, %v464
      %v480 = vadd.f32 %v479, %v467
      %v481 = vadd.f32 %v480, %v470
      %v482 = vadd.f32 %v481, %v473
      %v483 = vadd.f32 %v482, %v476
      %v484 = vrot.slane %v483, 4
      %v485 = vadd.f32 %v483, %v484
      %v486 = vrot.slane %v485, 2
      %v487 = vadd.f32 %v485, %v486
      %v488 = vrot.slane %v487, 1
      %v489 = vadd.f32 %v487, %v488
      %v490 = vmul.f32 %v321, %v321
      %v491 = vmul.f32 %v322, %v322
      %v492 = vmul.f32 %v323, %v323
      %v493 = vmul.f32 %v324, %v324
      %v494 = vmul.f32 %v325, %v325
      %v495 = vmul.f32 %v326, %v326
      %v496 = vmul.f32 %v327, %v327
      %v497 = vmul.f32 %v328, %v328
      %v498 = vmul.f32 %v329, %v329
      %v499 = vmul.f32 %v330, %v330
      %v500 = vmul.f32 %v331, %v331
      %v501 = vmul.f32 %v332, %v332
      %v502 = vmul.f32 %v333, %v333
      %v503 = vmul.f32 %v334, %v334
      %v504 = vmul.f32 %v335, %v335
      %v505 = vmul.f32 %v336, %v336
      %v506 = vmul.f32 %v321, %v329
      %v507 = vmul.f32 %v322, %v330
      %v508 = vmul.f32 %v323, %v331
      %v509 = vmul.f32 %v324, %v332
      %v510 = vmul.f32 %v325, %v333
      %v511 = vmul.f32 %v326, %v334
      %v512 = vmul.f32 %v327, %v335
      %v513 = vmul.f32 %v328, %v336
      %v515 = vsel %vm359, %v321, 0
      %v518 = vsel %vm359, %v322, 0
      %v521 = vsel %vm359, %v323, 0
      %v524 = vsel %vm359, %v324, 0
      %v527 = vsel %vm359, %v325, 0
      %v530 = vsel %vm359, %v326, 0
      %v533 = vsel %vm359, %v327, 0
      %v536 = vsel %vm359, %v328, 0
      %v539 = vsel %vm359, %v329, 0
      %v542 = vsel %vm359, %v330, 0
      %v545 = vsel %vm359, %v331, 0
      %v548 = vsel %vm359, %v332, 0
      %v551 = vsel %vm359, %v333, 0
      %v554 = vsel %vm359, %v334, 0
      %v557 = vsel %vm359, %v335, 0
      %v560 = vsel %vm359, %v336, 0
      %v563 = vsel %vm359, %v490, 0
      %v566 = vsel %vm359, %v491, 0
      %v569 = vsel %vm359, %v492, 0
      %v572 = vsel %vm359, %v493, 0
      %v575 = vsel %vm359, %v494, 0
      %v578 = vsel %vm359, %v495, 0
      %v581 = vsel %vm359, %v496, 0
      %v584 = vsel %vm359, %v497, 0
      %v587 = vsel %vm359, %v498, 0
      %v590 = vsel %vm359, %v499, 0
      %v593 = vsel %vm359, %v500, 0
      %v596 = vsel %vm359, %v501, 0
      %v599 = vsel %vm359, %v502, 0
      %v602 = vsel %vm359, %v503, 0
      %v605 = vsel %vm359, %v504, 0
      %v608 = vsel %vm359, %v505, 0
      %v611 = vsel %vm359, %v506, 0
      %v614 = vsel %vm359, %v507, 0
      %v617 = vsel %vm359, %v508, 0
      %v620 = vsel %vm359, %v509, 0
      %v623 = vsel %vm359, %v510, 0
      %v626 = vsel %vm359, %v511, 0
      %v629 = vsel %vm359, %v512, 0
      %v632 = vsel %vm359, %v513, 0
      %634 = vmatprep.subr.mxu0 0.0
      %635 = vmatpush1.msra.mxu0 %v341
      %636 = vmatprep.subr.mxu0 0.0
      %637 = vmatpush1.msra.mxu0 %v342
      %638 = vmatprep.subr.mxu0 0.0
      %639 = vmatpush1.msra.mxu0 0.0
      %640 = vmatprep.subr.mxu0 0.0
      %641 = vmatpush1.msra.mxu0 0.0
      %642 = vmatprep.subr.mxu0 0.0
      %643 = vmatpush1.msra.mxu0 0.0
      %644 = vmatprep.subr.mxu0 0.0
      %645 = vmatpush1.msra.mxu0 0.0
      %646 = vmatprep.subr.mxu0 0.0
      %647 = vmatpush1.msra.mxu0 0.0
      %648 = vmatprep.subr.mxu0 0.0
      %649 = vmatpush1.msra.mxu0 0.0
      %650 = vmatprep.subr.mxu0 0.0
      %651 = vmatpush1.msra.mxu0 0.0
      %652 = vmatprep.subr.mxu0 0.0
      %653 = vmatpush1.msra.mxu0 0.0
      %654 = vmatprep.subr.mxu0 0.0
      %655 = vmatpush1.msra.mxu0 0.0
      %656 = vmatprep.subr.mxu0 0.0
      %657 = vmatpush1.msra.mxu0 0.0
      %658 = vmatprep.subr.mxu0 0.0
      %659 = vmatpush1.msra.mxu0 0.0
      %660 = vmatprep.subr.mxu0 0.0
      %661 = vmatpush1.msra.mxu0 0.0
      %662 = vmatprep.subr.mxu0 0.0
      %663 = vmatpush1.msra.mxu0 0.0
      %664 = vmatprep.subr.mxu0 0.0
      %665 = vmatpush1.msra.mxu0 0.0
      %666 = vmatprep.subr.mxu0 0.0
      %667 = vmatpush1.msra.mxu0 0.0
      %668 = vmatprep.subr.mxu0 0.0
      %669 = vmatpush1.msra.mxu0 0.0
      %670 = vmatprep.subr.mxu0 0.0
      %671 = vmatpush1.msra.mxu0 0.0
      %672 = vmatprep.subr.mxu0 0.0
      %673 = vmatpush1.msra.mxu0 0.0
      %674 = vmatprep.subr.mxu0 0.0
      %675 = vmatpush1.msra.mxu0 0.0
      %676 = vmatprep.subr.mxu0 0.0
      %677 = vmatpush1.msra.mxu0 0.0
      %678 = vmatprep.subr.mxu0 0.0
      %679 = vmatpush1.msra.mxu0 0.0
      %680 = vmatprep.subr.mxu0 0.0
      %681 = vmatpush1.msra.mxu0 0.0
      %682 = vmatprep.subr.mxu0 0.0
      %683 = vmatpush1.msra.mxu0 0.0
      %684 = vmatprep.subr.mxu0 0.0
      %685 = vmatpush1.msra.mxu0 0.0
      %686 = vmatprep.subr.mxu0 0.0
      %687 = vmatpush1.msra.mxu0 0.0
      %688 = vmatprep.subr.mxu0 0.0
      %689 = vmatpush1.msra.mxu0 0.0
      %690 = vmatprep.subr.mxu0 0.0
      %691 = vmatpush1.msra.mxu0 0.0
      %692 = vmatprep.subr.mxu0 0.0
      %693 = vmatpush1.msra.mxu0 0.0
      %694 = vmatprep.subr.mxu0 0.0
      %695 = vmatpush1.msra.mxu0 0.0
      %696 = vmatprep.subr.mxu0 0.0
      %697 = vmatpush1.msra.mxu0 0.0
      %698 = vmatprep.mubr.f32.mxu0 0.0
      %699 = vmatmul.mubr.f32.gmra.mrb[0].mxu0 %v515
      %v700 = vpop.f32.mrb[0].mxu0
      %v701 = vadd.f32 0.0, %v700
      %v702 = vpop.f32.mrb[0].mxu0
      %703 = vmatprep.mubr.f32.mxu0 0.0
      %704 = vmatmul.mubr.f32.gmra.mrb[0].mxu0 %v518
      %v705 = vpop.f32.mrb[0].mxu0
      %v706 = vadd.f32 0.0, %v705
      %v707 = vpop.f32.mrb[0].mxu0
      %708 = vmatprep.mubr.f32.mxu0 0.0
      %709 = vmatmul.mubr.f32.gmra.mrb[0].mxu0 %v521
      %v710 = vpop.f32.mrb[0].mxu0
      %v711 = vadd.f32 0.0, %v710
      %v712 = vpop.f32.mrb[0].mxu0
      %713 = vmatprep.mubr.f32.mxu0 0.0
      %714 = vmatmul.mubr.f32.gmra.mrb[0].mxu0 %v524
      %v715 = vpop.f32.mrb[0].mxu0
      %v716 = vadd.f32 0.0, %v715
      %v717 = vpop.f32.mrb[0].mxu0
      %718 = vmatprep.mubr.f32.mxu0 0.0
      %719 = vmatmul.mubr.f32.gmra.mrb[0].mxu0 %v527
      %v720 = vpop.f32.mrb[0].mxu0
      %v721 = vadd.f32 0.0, %v720
      %v722 = vpop.f32.mrb[0].mxu0
      %723 = vmatprep.mubr.f32.mxu0 0.0
      %724 = vmatmul.mubr.f32.gmra.mrb[0].mxu0 %v530
      %v725 = vpop.f32.mrb[0].mxu0
      %v726 = vadd.f32 0.0, %v725
      %v727 = vpop.f32.mrb[0].mxu0
      %728 = vmatprep.mubr.f32.mxu0 0.0
      %729 = vmatmul.mubr.f32.gmra.mrb[0].mxu0 %v533
      %v730 = vpop.f32.mrb[0].mxu0
      %v731 = vadd.f32 0.0, %v730
      %v732 = vpop.f32.mrb[0].mxu0
      %733 = vmatprep.mubr.f32.mxu0 0.0
      %734 = vmatmul.mubr.f32.gmra.mrb[0].mxu0 %v536
      %v735 = vpop.f32.mrb[0].mxu0
      %v736 = vadd.f32 0.0, %v735
      %v737 = vpop.f32.mrb[0].mxu0
      %738 = vmatprep.mubr.f32.mxu0 0.0
      %739 = vmatmul.mubr.f32.gmra.mrb[0].mxu0 %v539
      %v740 = vpop.f32.mrb[0].mxu0
      %v741 = vadd.f32 0.0, %v740
      %v742 = vpop.f32.mrb[0].mxu0
      %743 = vmatprep.mubr.f32.mxu0 0.0
      %744 = vmatmul.mubr.f32.gmra.mrb[0].mxu0 %v542
      %v745 = vpop.f32.mrb[0].mxu0
      %v746 = vadd.f32 0.0, %v745
      %v747 = vpop.f32.mrb[0].mxu0
      %748 = vmatprep.mubr.f32.mxu0 0.0
      %749 = vmatmul.mubr.f32.gmra.mrb[0].mxu0 %v545
      %v750 = vpop.f32.mrb[0].mxu0
      %v751 = vadd.f32 0.0, %v750
      %v752 = vpop.f32.mrb[0].mxu0
      %753 = vmatprep.mubr.f32.mxu0 0.0
      %754 = vmatmul.mubr.f32.gmra.mrb[0].mxu0 %v548
      %v755 = vpop.f32.mrb[0].mxu0
      %v756 = vadd.f32 0.0, %v755
      %v757 = vpop.f32.mrb[0].mxu0
      %758 = vmatprep.mubr.f32.mxu0 0.0
      %759 = vmatmul.mubr.f32.gmra.mrb[0].mxu0 %v551
      %v760 = vpop.f32.mrb[0].mxu0
      %v761 = vadd.f32 0.0, %v760
      %v762 = vpop.f32.mrb[0].mxu0
      %763 = vmatprep.mubr.f32.mxu0 0.0
      %764 = vmatmul.mubr.f32.gmra.mrb[0].mxu0 %v554
      %v765 = vpop.f32.mrb[0].mxu0
      %v766 = vadd.f32 0.0, %v765
      %v767 = vpop.f32.mrb[0].mxu0
      %768 = vmatprep.mubr.f32.mxu0 0.0
      %769 = vmatmul.mubr.f32.gmra.mrb[0].mxu0 %v557
      %v770 = vpop.f32.mrb[0].mxu0
      %v771 = vadd.f32 0.0, %v770
      %v772 = vpop.f32.mrb[0].mxu0
      %773 = vmatprep.mubr.f32.mxu0 0.0
      %774 = vmatmul.mubr.f32.gmra.mrb[0].mxu0 %v560
      %v775 = vpop.f32.mrb[0].mxu0
      %v776 = vadd.f32 0.0, %v775
      %v777 = vpop.f32.mrb[0].mxu0
      %778 = vmatprep.mubr.f32.mxu0 0.0
      %779 = vmatmul.mubr.f32.gmra.mrb[0].mxu0 %v563
      %v780 = vpop.f32.mrb[0].mxu0
      %v781 = vadd.f32 0.0, %v780
      %v782 = vpop.f32.mrb[0].mxu0
      %783 = vmatprep.mubr.f32.mxu0 0.0
      %784 = vmatmul.mubr.f32.gmra.mrb[0].mxu0 %v566
      %v785 = vpop.f32.mrb[0].mxu0
      %v786 = vadd.f32 0.0, %v785
      %v787 = vpop.f32.mrb[0].mxu0
      %788 = vmatprep.mubr.f32.mxu0 0.0
      %789 = vmatmul.mubr.f32.gmra.mrb[0].mxu0 %v569
      %v790 = vpop.f32.mrb[0].mxu0
      %v791 = vadd.f32 0.0, %v790
      %v792 = vpop.f32.mrb[0].mxu0
      %793 = vmatprep.mubr.f32.mxu0 0.0
      %794 = vmatmul.mubr.f32.gmra.mrb[0].mxu0 %v572
      %v795 = vpop.f32.mrb[0].mxu0
      %v796 = vadd.f32 0.0, %v795
      %v797 = vpop.f32.mrb[0].mxu0
      %798 = vmatprep.mubr.f32.mxu0 0.0
      %799 = vmatmul.mubr.f32.gmra.mrb[0].mxu0 %v575
      %v800 = vpop.f32.mrb[0].mxu0
      %v801 = vadd.f32 0.0, %v800
      %v802 = vpop.f32.mrb[0].mxu0
      %803 = vmatprep.mubr.f32.mxu0 0.0
      %804 = vmatmul.mubr.f32.gmra.mrb[0].mxu0 %v578
      %v805 = vpop.f32.mrb[0].mxu0
      %v806 = vadd.f32 0.0, %v805
      %v807 = vpop.f32.mrb[0].mxu0
      %808 = vmatprep.mubr.f32.mxu0 0.0
      %809 = vmatmul.mubr.f32.gmra.mrb[0].mxu0 %v581
      %v810 = vpop.f32.mrb[0].mxu0
      %v811 = vadd.f32 0.0, %v810
      %v812 = vpop.f32.mrb[0].mxu0
      %813 = vmatprep.mubr.f32.mxu0 0.0
      %814 = vmatmul.mubr.f32.gmra.mrb[0].mxu0 %v584
      %v815 = vpop.f32.mrb[0].mxu0
      %v816 = vadd.f32 0.0, %v815
      %v817 = vpop.f32.mrb[0].mxu0
      %818 = vmatprep.mubr.f32.mxu0 0.0
      %819 = vmatmul.mubr.f32.gmra.mrb[0].mxu0 %v587
      %v820 = vpop.f32.mrb[0].mxu0
      %v821 = vadd.f32 0.0, %v820
      %v822 = vpop.f32.mrb[0].mxu0
      %823 = vmatprep.mubr.f32.mxu0 0.0
      %824 = vmatmul.mubr.f32.gmra.mrb[0].mxu0 %v590
      %v825 = vpop.f32.mrb[0].mxu0
      %v826 = vadd.f32 0.0, %v825
      %v827 = vpop.f32.mrb[0].mxu0
      %828 = vmatprep.mubr.f32.mxu0 0.0
      %829 = vmatmul.mubr.f32.gmra.mrb[0].mxu0 %v593
      %v830 = vpop.f32.mrb[0].mxu0
      %v831 = vadd.f32 0.0, %v830
      %v832 = vpop.f32.mrb[0].mxu0
      %833 = vmatprep.mubr.f32.mxu0 0.0
      %834 = vmatmul.mubr.f32.gmra.mrb[0].mxu0 %v596
      %v835 = vpop.f32.mrb[0].mxu0
      %v836 = vadd.f32 0.0, %v835
      %v837 = vpop.f32.mrb[0].mxu0
      %838 = vmatprep.mubr.f32.mxu0 0.0
      %839 = vmatmul.mubr.f32.gmra.mrb[0].mxu0 %v599
      %v840 = vpop.f32.mrb[0].mxu0
      %v841 = vadd.f32 0.0, %v840
      %v842 = vpop.f32.mrb[0].mxu0
      %843 = vmatprep.mubr.f32.mxu0 0.0
      %844 = vmatmul.mubr.f32.gmra.mrb[0].mxu0 %v602
      %v845 = vpop.f32.mrb[0].mxu0
      %v846 = vadd.f32 0.0, %v845
      %v847 = vpop.f32.mrb[0].mxu0
      %848 = vmatprep.mubr.f32.mxu0 0.0
      %849 = vmatmul.mubr.f32.gmra.mrb[0].mxu0 %v605
      %v850 = vpop.f32.mrb[0].mxu0
      %v851 = vadd.f32 0.0, %v850
      %v852 = vpop.f32.mrb[0].mxu0
      %853 = vmatprep.mubr.f32.mxu0 0.0
      %854 = vmatmul.mubr.f32.gmra.mrb[0].mxu0 %v608
      %v855 = vpop.f32.mrb[0].mxu0
      %v856 = vadd.f32 0.0, %v855
      %v857 = vpop.f32.mrb[0].mxu0
      %858 = vmatprep.mubr.f32.mxu0 0.0
      %859 = vmatmul.mubr.f32.gmra.mrb[0].mxu0 %v611
      %v860 = vpop.f32.mrb[0].mxu0
      %v861 = vadd.f32 0.0, %v860
      %v862 = vpop.f32.mrb[0].mxu0
      %863 = vmatprep.mubr.f32.mxu0 0.0
      %864 = vmatmul.mubr.f32.gmra.mrb[0].mxu0 %v614
      %v865 = vpop.f32.mrb[0].mxu0
      %v866 = vadd.f32 0.0, %v865
      %v867 = vpop.f32.mrb[0].mxu0
      %868 = vmatprep.mubr.f32.mxu0 0.0
      %869 = vmatmul.mubr.f32.gmra.mrb[0].mxu0 %v617
      %v870 = vpop.f32.mrb[0].mxu0
      %v871 = vadd.f32 0.0, %v870
      %v872 = vpop.f32.mrb[0].mxu0
      %873 = vmatprep.mubr.f32.mxu0 0.0
      %874 = vmatmul.mubr.f32.gmra.mrb[0].mxu0 %v620
      %v875 = vpop.f32.mrb[0].mxu0
      %v876 = vadd.f32 0.0, %v875
      %v877 = vpop.f32.mrb[0].mxu0
      %878 = vmatprep.mubr.f32.mxu0 0.0
      %879 = vmatmul.mubr.f32.gmra.mrb[0].mxu0 %v623
      %v880 = vpop.f32.mrb[0].mxu0
      %v881 = vadd.f32 0.0, %v880
      %v882 = vpop.f32.mrb[0].mxu0
      %883 = vmatprep.mubr.f32.mxu0 0.0
      %884 = vmatmul.mubr.f32.gmra.mrb[0].mxu0 %v626
      %v885 = vpop.f32.mrb[0].mxu0
      %v886 = vadd.f32 0.0, %v885
      %v887 = vpop.f32.mrb[0].mxu0
      %888 = vmatprep.mubr.f32.mxu0 0.0
      %889 = vmatmul.mubr.f32.gmra.mrb[0].mxu0 %v629
      %v890 = vpop.f32.mrb[0].mxu0
      %v891 = vadd.f32 0.0, %v890
      %v892 = vpop.f32.mrb[0].mxu0
      %893 = vmatprep.mubr.f32.mxu0 0.0
      %894 = vmatmul.mubr.f32.gmra.mrb[0].mxu0 %v632
      %v895 = vpop.f32.mrb[0].mxu0
      %v896 = vadd.f32 0.0, %v895
      %v897 = vpop.f32.mrb[0].mxu0
      %898 = vdwg.mxu0
      %v900 = vsel %vm359, %v339, 0
      %v903 = vsel %vm359, %v340, 0
      %905 = vmatprep.subr.mxu0 0.0
      %906 = vmatpush1.msra.mxu0 %v701
      %907 = vmatprep.subr.mxu0 0.0
      %908 = vmatpush1.msra.mxu0 %v706
      %909 = vmatprep.subr.mxu0 0.0
      %910 = vmatpush1.msra.mxu0 0.0
      %911 = vmatprep.subr.mxu0 0.0
      %912 = vmatpush1.msra.mxu0 0.0
      %913 = vmatprep.subr.mxu0 0.0
      %914 = vmatpush1.msra.mxu0 0.0
      %915 = vmatprep.subr.mxu0 0.0
      %916 = vmatpush1.msra.mxu0 0.0
      %917 = vmatprep.subr.mxu0 0.0
      %918 = vmatpush1.msra.mxu0 0.0
      %919 = vmatprep.subr.mxu0 0.0
      %920 = vmatpush1.msra.mxu0 0.0
      %921 = vmatprep.subr.mxu0 0.0
      %922 = vmatpush1.msra.mxu0 0.0
      %923 = vmatprep.subr.mxu0 0.0
      %924 = vmatpush1.msra.mxu0 0.0
      %925 = vmatprep.subr.mxu0 0.0
      %926 = vmatpush1.msra.mxu0 0.0
      %927 = vmatprep.subr.mxu0 0.0
      %928 = vmatpush1.msra.mxu0 0.0
      %929 = vmatprep.subr.mxu0 0.0
      %930 = vmatpush1.msra.mxu0 0.0
      %931 = vmatprep.subr.mxu0 0.0
      %932 = vmatpush1.msra.mxu0 0.0
      %933 = vmatprep.subr.mxu0 0.0
      %934 = vmatpush1.msra.mxu0 0.0
      %935 = vmatprep.subr.mxu0 0.0
      %936 = vmatpush1.msra.mxu0 0.0
      %937 = vmatprep.subr.mxu0 0.0
      %938 = vmatpush1.msra.mxu0 0.0
      %939 = vmatprep.subr.mxu0 0.0
      %940 = vmatpush1.msra.mxu0 0.0
      %941 = vmatprep.subr.mxu0 0.0
      %942 = vmatpush1.msra.mxu0 0.0
      %943 = vmatprep.subr.mxu0 0.0
      %944 = vmatpush1.msra.mxu0 0.0
      %945 = vmatprep.subr.mxu0 0.0
      %946 = vmatpush1.msra.mxu0 0.0
      %947 = vmatprep.subr.mxu0 0.0
      %948 = vmatpush1.msra.mxu0 0.0
      %949 = vmatprep.subr.mxu0 0.0
      %950 = vmatpush1.msra.mxu0 0.0
      %951 = vmatprep.subr.mxu0 0.0
      %952 = vmatpush1.msra.mxu0 0.0
      %953 = vmatprep.subr.mxu0 0.0
      %954 = vmatpush1.msra.mxu0 0.0
      %955 = vmatprep.subr.mxu0 0.0
      %956 = vmatpush1.msra.mxu0 0.0
      %957 = vmatprep.subr.mxu0 0.0
      %958 = vmatpush1.msra.mxu0 0.0
      %959 = vmatprep.subr.mxu0 0.0
      %960 = vmatpush1.msra.mxu0 0.0
      %961 = vmatprep.subr.mxu0 0.0
      %962 = vmatpush1.msra.mxu0 0.0
      %963 = vmatprep.subr.mxu0 0.0
      %964 = vmatpush1.msra.mxu0 0.0
      %965 = vmatprep.subr.mxu0 0.0
      %966 = vmatpush1.msra.mxu0 0.0
      %967 = vmatprep.subr.mxu0 0.0
      %968 = vmatpush1.msra.mxu0 0.0
      %969 = vmatprep.mubr.f32.mxu0 0.0
      %970 = vmatmul.mubr.f32.gmra.mrb[0].mxu0 %v900
      %v971 = vpop.f32.mrb[0].mxu0
      %v972 = vadd.f32 0.0, %v971
      %v973 = vpop.f32.mrb[0].mxu0
      %974 = vmatprep.mubr.f32.mxu0 0.0
      %975 = vmatmul.mubr.f32.gmra.mrb[0].mxu0 %v903
      %v976 = vpop.f32.mrb[0].mxu0
      %v977 = vadd.f32 0.0, %v976
      %v978 = vpop.f32.mrb[0].mxu0
      %979 = vdwg.mxu0
      %980 = vmatprep.subr.mxu0 0.0
      %981 = vmatpush1.msra.mxu0 %v711
      %982 = vmatprep.subr.mxu0 0.0
      %983 = vmatpush1.msra.mxu0 %v716
      %984 = vmatprep.subr.mxu0 0.0
      %985 = vmatpush1.msra.mxu0 0.0
      %986 = vmatprep.subr.mxu0 0.0
      %987 = vmatpush1.msra.mxu0 0.0
      %988 = vmatprep.subr.mxu0 0.0
      %989 = vmatpush1.msra.mxu0 0.0
      %990 = vmatprep.subr.mxu0 0.0
      %991 = vmatpush1.msra.mxu0 0.0
      %992 = vmatprep.subr.mxu0 0.0
      %993 = vmatpush1.msra.mxu0 0.0
      %994 = vmatprep.subr.mxu0 0.0
      %995 = vmatpush1.msra.mxu0 0.0
      %996 = vmatprep.subr.mxu0 0.0
      %997 = vmatpush1.msra.mxu0 0.0
      %998 = vmatprep.subr.mxu0 0.0
      %999 = vmatpush1.msra.mxu0 0.0
      %1000 = vmatprep.subr.mxu0 0.0
      %1001 = vmatpush1.msra.mxu0 0.0
      %1002 = vmatprep.subr.mxu0 0.0
      %1003 = vmatpush1.msra.mxu0 0.0
      %1004 = vmatprep.subr.mxu0 0.0
      %1005 = vmatpush1.msra.mxu0 0.0
      %1006 = vmatprep.subr.mxu0 0.0
      %1007 = vmatpush1.msra.mxu0 0.0
      %1008 = vmatprep.subr.mxu0 0.0
      %1009 = vmatpush1.msra.mxu0 0.0
      %1010 = vmatprep.subr.mxu0 0.0
      %1011 = vmatpush1.msra.mxu0 0.0
      %1012 = vmatprep.subr.mxu0 0.0
      %1013 = vmatpush1.msra.mxu0 0.0
      %1014 = vmatprep.subr.mxu0 0.0
      %1015 = vmatpush1.msra.mxu0 0.0
      %1016 = vmatprep.subr.mxu0 0.0
      %1017 = vmatpush1.msra.mxu0 0.0
      %1018 = vmatprep.subr.mxu0 0.0
      %1019 = vmatpush1.msra.mxu0 0.0
      %1020 = vmatprep.subr.mxu0 0.0
      %1021 = vmatpush1.msra.mxu0 0.0
      %1022 = vmatprep.subr.mxu0 0.0
      %1023 = vmatpush1.msra.mxu0 0.0
      %1024 = vmatprep.subr.mxu0 0.0
      %1025 = vmatpush1.msra.mxu0 0.0
      %1026 = vmatprep.subr.mxu0 0.0
      %1027 = vmatpush1.msra.mxu0 0.0
      %1028 = vmatprep.subr.mxu0 0.0
      %1029 = vmatpush1.msra.mxu0 0.0
      %1030 = vmatprep.subr.mxu0 0.0
      %1031 = vmatpush1.msra.mxu0 0.0
      %1032 = vmatprep.subr.mxu0 0.0
      %1033 = vmatpush1.msra.mxu0 0.0
      %1034 = vmatprep.subr.mxu0 0.0
      %1035 = vmatpush1.msra.mxu0 0.0
      %1036 = vmatprep.subr.mxu0 0.0
      %1037 = vmatpush1.msra.mxu0 0.0
      %1038 = vmatprep.subr.mxu0 0.0
      %1039 = vmatpush1.msra.mxu0 0.0
      %1040 = vmatprep.subr.mxu0 0.0
      %1041 = vmatpush1.msra.mxu0 0.0
      %1042 = vmatprep.subr.mxu0 0.0
      %1043 = vmatpush1.msra.mxu0 0.0
      %1044 = vmatprep.mubr.f32.mxu0 0.0
      %1045 = vmatmul.mubr.f32.gmra.mrb[0].mxu0 %v900
      %v1046 = vpop.f32.mrb[0].mxu0
      %v1047 = vadd.f32 0.0, %v1046
      %v1048 = vpop.f32.mrb[0].mxu0
      %1049 = vmatprep.mubr.f32.mxu0 0.0
      %1050 = vmatmul.mubr.f32.gmra.mrb[0].mxu0 %v903
      %v1051 = vpop.f32.mrb[0].mxu0
      %v1052 = vadd.f32 0.0, %v1051
      %v1053 = vpop.f32.mrb[0].mxu0
      %1054 = vdwg.mxu0
      %1055 = vmatprep.subr.mxu0 0.0
      %1056 = vmatpush1.msra.mxu0 %v721
      %1057 = vmatprep.subr.mxu0 0.0
      %1058 = vmatpush1.msra.mxu0 %v726
      %1059 = vmatprep.subr.mxu0 0.0
      %1060 = vmatpush1.msra.mxu0 0.0
      %1061 = vmatprep.subr.mxu0 0.0
      %1062 = vmatpush1.msra.mxu0 0.0
      %1063 = vmatprep.subr.mxu0 0.0
      %1064 = vmatpush1.msra.mxu0 0.0
      %1065 = vmatprep.subr.mxu0 0.0
      %1066 = vmatpush1.msra.mxu0 0.0
      %1067 = vmatprep.subr.mxu0 0.0
      %1068 = vmatpush1.msra.mxu0 0.0
      %1069 = vmatprep.subr.mxu0 0.0
      %1070 = vmatpush1.msra.mxu0 0.0
      %1071 = vmatprep.subr.mxu0 0.0
      %1072 = vmatpush1.msra.mxu0 0.0
      %1073 = vmatprep.subr.mxu0 0.0
      %1074 = vmatpush1.msra.mxu0 0.0
      %1075 = vmatprep.subr.mxu0 0.0
      %1076 = vmatpush1.msra.mxu0 0.0
      %1077 = vmatprep.subr.mxu0 0.0
      %1078 = vmatpush1.msra.mxu0 0.0
      %1079 = vmatprep.subr.mxu0 0.0
      %1080 = vmatpush1.msra.mxu0 0.0
      %1081 = vmatprep.subr.mxu0 0.0
      %1082 = vmatpush1.msra.mxu0 0.0
      %1083 = vmatprep.subr.mxu0 0.0
      %1084 = vmatpush1.msra.mxu0 0.0
      %1085 = vmatprep.subr.mxu0 0.0
      %1086 = vmatpush1.msra.mxu0 0.0
      %1087 = vmatprep.subr.mxu0 0.0
      %1088 = vmatpush1.msra.mxu0 0.0
      %1089 = vmatprep.subr.mxu0 0.0
      %1090 = vmatpush1.msra.mxu0 0.0
      %1091 = vmatprep.subr.mxu0 0.0
      %1092 = vmatpush1.msra.mxu0 0.0
      %1093 = vmatprep.subr.mxu0 0.0
      %1094 = vmatpush1.msra.mxu0 0.0
      %1095 = vmatprep.subr.mxu0 0.0
      %1096 = vmatpush1.msra.mxu0 0.0
      %1097 = vmatprep.subr.mxu0 0.0
      %1098 = vmatpush1.msra.mxu0 0.0
      %1099 = vmatprep.subr.mxu0 0.0
      %1100 = vmatpush1.msra.mxu0 0.0
      %1101 = vmatprep.subr.mxu0 0.0
      %1102 = vmatpush1.msra.mxu0 0.0
      %1103 = vmatprep.subr.mxu0 0.0
      %1104 = vmatpush1.msra.mxu0 0.0
      %1105 = vmatprep.subr.mxu0 0.0
      %1106 = vmatpush1.msra.mxu0 0.0
      %1107 = vmatprep.subr.mxu0 0.0
      %1108 = vmatpush1.msra.mxu0 0.0
      %1109 = vmatprep.subr.mxu0 0.0
      %1110 = vmatpush1.msra.mxu0 0.0
      %1111 = vmatprep.subr.mxu0 0.0
      %1112 = vmatpush1.msra.mxu0 0.0
      %1113 = vmatprep.subr.mxu0 0.0
      %1114 = vmatpush1.msra.mxu0 0.0
      %1115 = vmatprep.subr.mxu0 0.0
      %1116 = vmatpush1.msra.mxu0 0.0
      %1117 = vmatprep.subr.mxu0 0.0
      %1118 = vmatpush1.msra.mxu0 0.0
      %1119 = vmatprep.mubr.f32.mxu0 0.0
      %1120 = vmatmul.mubr.f32.gmra.mrb[0].mxu0 %v900
      %v1121 = vpop.f32.mrb[0].mxu0
      %v1122 = vadd.f32 0.0, %v1121
      %v1123 = vpop.f32.mrb[0].mxu0
      %1124 = vmatprep.mubr.f32.mxu0 0.0
      %1125 = vmatmul.mubr.f32.gmra.mrb[0].mxu0 %v903
      %v1126 = vpop.f32.mrb[0].mxu0
      %v1127 = vadd.f32 0.0, %v1126
      %v1128 = vpop.f32.mrb[0].mxu0
      %1129 = vdwg.mxu0
      %1130 = vmatprep.subr.mxu0 0.0
      %1131 = vmatpush1.msra.mxu0 %v731
      %1132 = vmatprep.subr.mxu0 0.0
      %1133 = vmatpush1.msra.mxu0 %v736
      %1134 = vmatprep.subr.mxu0 0.0
      %1135 = vmatpush1.msra.mxu0 0.0
      %1136 = vmatprep.subr.mxu0 0.0
      %1137 = vmatpush1.msra.mxu0 0.0
      %1138 = vmatprep.subr.mxu0 0.0
      %1139 = vmatpush1.msra.mxu0 0.0
      %1140 = vmatprep.subr.mxu0 0.0
      %1141 = vmatpush1.msra.mxu0 0.0
      %1142 = vmatprep.subr.mxu0 0.0
      %1143 = vmatpush1.msra.mxu0 0.0
      %1144 = vmatprep.subr.mxu0 0.0
      %1145 = vmatpush1.msra.mxu0 0.0
      %1146 = vmatprep.subr.mxu0 0.0
      %1147 = vmatpush1.msra.mxu0 0.0
      %1148 = vmatprep.subr.mxu0 0.0
      %1149 = vmatpush1.msra.mxu0 0.0
      %1150 = vmatprep.subr.mxu0 0.0
      %1151 = vmatpush1.msra.mxu0 0.0
      %1152 = vmatprep.subr.mxu0 0.0
      %1153 = vmatpush1.msra.mxu0 0.0
      %1154 = vmatprep.subr.mxu0 0.0
      %1155 = vmatpush1.msra.mxu0 0.0
      %1156 = vmatprep.subr.mxu0 0.0
      %1157 = vmatpush1.msra.mxu0 0.0
      %1158 = vmatprep.subr.mxu0 0.0
      %1159 = vmatpush1.msra.mxu0 0.0
      %1160 = vmatprep.subr.mxu0 0.0
      %1161 = vmatpush1.msra.mxu0 0.0
      %1162 = vmatprep.subr.mxu0 0.0
      %1163 = vmatpush1.msra.mxu0 0.0
      %1164 = vmatprep.subr.mxu0 0.0
      %1165 = vmatpush1.msra.mxu0 0.0
      %1166 = vmatprep.subr.mxu0 0.0
      %1167 = vmatpush1.msra.mxu0 0.0
      %1168 = vmatprep.subr.mxu0 0.0
      %1169 = vmatpush1.msra.mxu0 0.0
      %1170 = vmatprep.subr.mxu0 0.0
      %1171 = vmatpush1.msra.mxu0 0.0
      %1172 = vmatprep.subr.mxu0 0.0
      %1173 = vmatpush1.msra.mxu0 0.0
      %1174 = vmatprep.subr.mxu0 0.0
      %1175 = vmatpush1.msra.mxu0 0.0
      %1176 = vmatprep.subr.mxu0 0.0
      %1177 = vmatpush1.msra.mxu0 0.0
      %1178 = vmatprep.subr.mxu0 0.0
      %1179 = vmatpush1.msra.mxu0 0.0
      %1180 = vmatprep.subr.mxu0 0.0
      %1181 = vmatpush1.msra.mxu0 0.0
      %1182 = vmatprep.subr.mxu0 0.0
      %1183 = vmatpush1.msra.mxu0 0.0
      %1184 = vmatprep.subr.mxu0 0.0
      %1185 = vmatpush1.msra.mxu0 0.0
      %1186 = vmatprep.subr.mxu0 0.0
      %1187 = vmatpush1.msra.mxu0 0.0
      %1188 = vmatprep.subr.mxu0 0.0
      %1189 = vmatpush1.msra.mxu0 0.0
      %1190 = vmatprep.subr.mxu0 0.0
      %1191 = vmatpush1.msra.mxu0 0.0
      %1192 = vmatprep.subr.mxu0 0.0
      %1193 = vmatpush1.msra.mxu0 0.0
      %1194 = vmatprep.mubr.f32.mxu0 0.0
      %1195 = vmatmul.mubr.f32.gmra.mrb[0].mxu0 %v900
      %v1196 = vpop.f32.mrb[0].mxu0
      %v1197 = vadd.f32 0.0, %v1196
      %v1198 = vpop.f32.mrb[0].mxu0
      %1199 = vmatprep.mubr.f32.mxu0 0.0
      %1200 = vmatmul.mubr.f32.gmra.mrb[0].mxu0 %v903
      %v1201 = vpop.f32.mrb[0].mxu0
      %v1202 = vadd.f32 0.0, %v1201
      %v1203 = vpop.f32.mrb[0].mxu0
      %1204 = vdwg.mxu0
      %1205 = vmatprep.subr.mxu0 0.0
      %1206 = vmatpush1.msra.mxu0 %v741
      %1207 = vmatprep.subr.mxu0 0.0
      %1208 = vmatpush1.msra.mxu0 %v746
      %1209 = vmatprep.subr.mxu0 0.0
      %1210 = vmatpush1.msra.mxu0 0.0
      %1211 = vmatprep.subr.mxu0 0.0
      %1212 = vmatpush1.msra.mxu0 0.0
      %1213 = vmatprep.subr.mxu0 0.0
      %1214 = vmatpush1.msra.mxu0 0.0
      %1215 = vmatprep.subr.mxu0 0.0
      %1216 = vmatpush1.msra.mxu0 0.0
      %1217 = vmatprep.subr.mxu0 0.0
      %1218 = vmatpush1.msra.mxu0 0.0
      %1219 = vmatprep.subr.mxu0 0.0
      %1220 = vmatpush1.msra.mxu0 0.0
      %1221 = vmatprep.subr.mxu0 0.0
      %1222 = vmatpush1.msra.mxu0 0.0
      %1223 = vmatprep.subr.mxu0 0.0
      %1224 = vmatpush1.msra.mxu0 0.0
      %1225 = vmatprep.subr.mxu0 0.0
      %1226 = vmatpush1.msra.mxu0 0.0
      %1227 = vmatprep.subr.mxu0 0.0
      %1228 = vmatpush1.msra.mxu0 0.0
      %1229 = vmatprep.subr.mxu0 0.0
      %1230 = vmatpush1.msra.mxu0 0.0
      %1231 = vmatprep.subr.mxu0 0.0
      %1232 = vmatpush1.msra.mxu0 0.0
      %1233 = vmatprep.subr.mxu0 0.0
      %1234 = vmatpush1.msra.mxu0 0.0
      %1235 = vmatprep.subr.mxu0 0.0
      %1236 = vmatpush1.msra.mxu0 0.0
      %1237 = vmatprep.subr.mxu0 0.0
      %1238 = vmatpush1.msra.mxu0 0.0
      %1239 = vmatprep.subr.mxu0 0.0
      %1240 = vmatpush1.msra.mxu0 0.0
      %1241 = vmatprep.subr.mxu0 0.0
      %1242 = vmatpush1.msra.mxu0 0.0
      %1243 = vmatprep.subr.mxu0 0.0
      %1244 = vmatpush1.msra.mxu0 0.0
      %1245 = vmatprep.subr.mxu0 0.0
      %1246 = vmatpush1.msra.mxu0 0.0
      %1247 = vmatprep.subr.mxu0 0.0
      %1248 = vmatpush1.msra.mxu0 0.0
      %1249 = vmatprep.subr.mxu0 0.0
      %1250 = vmatpush1.msra.mxu0 0.0
      %1251 = vmatprep.subr.mxu0 0.0
      %1252 = vmatpush1.msra.mxu0 0.0
      %1253 = vmatprep.subr.mxu0 0.0
      %1254 = vmatpush1.msra.mxu0 0.0
      %1255 = vmatprep.subr.mxu0 0.0
      %1256 = vmatpush1.msra.mxu0 0.0
      %1257 = vmatprep.subr.mxu0 0.0
      %1258 = vmatpush1.msra.mxu0 0.0
      %1259 = vmatprep.subr.mxu0 0.0
      %1260 = vmatpush1.msra.mxu0 0.0
      %1261 = vmatprep.subr.mxu0 0.0
      %1262 = vmatpush1.msra.mxu0 0.0
      %1263 = vmatprep.subr.mxu0 0.0
      %1264 = vmatpush1.msra.mxu0 0.0
      %1265 = vmatprep.subr.mxu0 0.0
      %1266 = vmatpush1.msra.mxu0 0.0
      %1267 = vmatprep.subr.mxu0 0.0
      %1268 = vmatpush1.msra.mxu0 0.0
      %1269 = vmatprep.mubr.f32.mxu0 0.0
      %1270 = vmatmul.mubr.f32.gmra.mrb[0].mxu0 %v900
      %v1271 = vpop.f32.mrb[0].mxu0
      %v1272 = vadd.f32 0.0, %v1271
      %v1273 = vpop.f32.mrb[0].mxu0
      %1274 = vmatprep.mubr.f32.mxu0 0.0
      %1275 = vmatmul.mubr.f32.gmra.mrb[0].mxu0 %v903
      %v1276 = vpop.f32.mrb[0].mxu0
      %v1277 = vadd.f32 0.0, %v1276
      %v1278 = vpop.f32.mrb[0].mxu0
      %1279 = vdwg.mxu0
      %1280 = vmatprep.subr.mxu0 0.0
      %1281 = vmatpush1.msra.mxu0 %v751
      %1282 = vmatprep.subr.mxu0 0.0
      %1283 = vmatpush1.msra.mxu0 %v756
      %1284 = vmatprep.subr.mxu0 0.0
      %1285 = vmatpush1.msra.mxu0 0.0
      %1286 = vmatprep.subr.mxu0 0.0
      %1287 = vmatpush1.msra.mxu0 0.0
      %1288 = vmatprep.subr.mxu0 0.0
      %1289 = vmatpush1.msra.mxu0 0.0
      %1290 = vmatprep.subr.mxu0 0.0
      %1291 = vmatpush1.msra.mxu0 0.0
      %1292 = vmatprep.subr.mxu0 0.0
      %1293 = vmatpush1.msra.mxu0 0.0
      %1294 = vmatprep.subr.mxu0 0.0
      %1295 = vmatpush1.msra.mxu0 0.0
      %1296 = vmatprep.subr.mxu0 0.0
      %1297 = vmatpush1.msra.mxu0 0.0
      %1298 = vmatprep.subr.mxu0 0.0
      %1299 = vmatpush1.msra.mxu0 0.0
      %1300 = vmatprep.subr.mxu0 0.0
      %1301 = vmatpush1.msra.mxu0 0.0
      %1302 = vmatprep.subr.mxu0 0.0
      %1303 = vmatpush1.msra.mxu0 0.0
      %1304 = vmatprep.subr.mxu0 0.0
      %1305 = vmatpush1.msra.mxu0 0.0
      %1306 = vmatprep.subr.mxu0 0.0
      %1307 = vmatpush1.msra.mxu0 0.0
      %1308 = vmatprep.subr.mxu0 0.0
      %1309 = vmatpush1.msra.mxu0 0.0
      %1310 = vmatprep.subr.mxu0 0.0
      %1311 = vmatpush1.msra.mxu0 0.0
      %1312 = vmatprep.subr.mxu0 0.0
      %1313 = vmatpush1.msra.mxu0 0.0
      %1314 = vmatprep.subr.mxu0 0.0
      %1315 = vmatpush1.msra.mxu0 0.0
      %1316 = vmatprep.subr.mxu0 0.0
      %1317 = vmatpush1.msra.mxu0 0.0
      %1318 = vmatprep.subr.mxu0 0.0
      %1319 = vmatpush1.msra.mxu0 0.0
      %1320 = vmatprep.subr.mxu0 0.0
      %1321 = vmatpush1.msra.mxu0 0.0
      %1322 = vmatprep.subr.mxu0 0.0
      %1323 = vmatpush1.msra.mxu0 0.0
      %1324 = vmatprep.subr.mxu0 0.0
      %1325 = vmatpush1.msra.mxu0 0.0
      %1326 = vmatprep.subr.mxu0 0.0
      %1327 = vmatpush1.msra.mxu0 0.0
      %1328 = vmatprep.subr.mxu0 0.0
      %1329 = vmatpush1.msra.mxu0 0.0
      %1330 = vmatprep.subr.mxu0 0.0
      %1331 = vmatpush1.msra.mxu0 0.0
      %1332 = vmatprep.subr.mxu0 0.0
      %1333 = vmatpush1.msra.mxu0 0.0
      %1334 = vmatprep.subr.mxu0 0.0
      %1335 = vmatpush1.msra.mxu0 0.0
      %1336 = vmatprep.subr.mxu0 0.0
      %1337 = vmatpush1.msra.mxu0 0.0
      %1338 = vmatprep.subr.mxu0 0.0
      %1339 = vmatpush1.msra.mxu0 0.0
      %1340 = vmatprep.subr.mxu0 0.0
      %1341 = vmatpush1.msra.mxu0 0.0
      %1342 = vmatprep.subr.mxu0 0.0
      %1343 = vmatpush1.msra.mxu0 0.0
      %1344 = vmatprep.mubr.f32.mxu0 0.0
      %1345 = vmatmul.mubr.f32.gmra.mrb[0].mxu0 %v900
      %v1346 = vpop.f32.mrb[0].mxu0
      %v1347 = vadd.f32 0.0, %v1346
      %v1348 = vpop.f32.mrb[0].mxu0
      %1349 = vmatprep.mubr.f32.mxu0 0.0
      %1350 = vmatmul.mubr.f32.gmra.mrb[0].mxu0 %v903
      %v1351 = vpop.f32.mrb[0].mxu0
      %v1352 = vadd.f32 0.0, %v1351
      %v1353 = vpop.f32.mrb[0].mxu0
      %1354 = vdwg.mxu0
      %1355 = vmatprep.subr.mxu0 0.0
      %1356 = vmatpush1.msra.mxu0 %v761
      %1357 = vmatprep.subr.mxu0 0.0
      %1358 = vmatpush1.msra.mxu0 %v766
      %1359 = vmatprep.subr.mxu0 0.0
      %1360 = vmatpush1.msra.mxu0 0.0
      %1361 = vmatprep.subr.mxu0 0.0
      %1362 = vmatpush1.msra.mxu0 0.0
      %1363 = vmatprep.subr.mxu0 0.0
      %1364 = vmatpush1.msra.mxu0 0.0
      %1365 = vmatprep.subr.mxu0 0.0
      %1366 = vmatpush1.msra.mxu0 0.0
      %1367 = vmatprep.subr.mxu0 0.0
      %1368 = vmatpush1.msra.mxu0 0.0
      %1369 = vmatprep.subr.mxu0 0.0
      %1370 = vmatpush1.msra.mxu0 0.0
      %1371 = vmatprep.subr.mxu0 0.0
      %1372 = vmatpush1.msra.mxu0 0.0
      %1373 = vmatprep.subr.mxu0 0.0
      %1374 = vmatpush1.msra.mxu0 0.0
      %1375 = vmatprep.subr.mxu0 0.0
      %1376 = vmatpush1.msra.mxu0 0.0
      %1377 = vmatprep.subr.mxu0 0.0
      %1378 = vmatpush1.msra.mxu0 0.0
      %1379 = vmatprep.subr.mxu0 0.0
      %1380 = vmatpush1.msra.mxu0 0.0
      %1381 = vmatprep.subr.mxu0 0.0
      %1382 = vmatpush1.msra.mxu0 0.0
      %1383 = vmatprep.subr.mxu0 0.0
      %1384 = vmatpush1.msra.mxu0 0.0
      %1385 = vmatprep.subr.mxu0 0.0
      %1386 = vmatpush1.msra.mxu0 0.0
      %1387 = vmatprep.subr.mxu0 0.0
      %1388 = vmatpush1.msra.mxu0 0.0
      %1389 = vmatprep.subr.mxu0 0.0
      %1390 = vmatpush1.msra.mxu0 0.0
      %1391 = vmatprep.subr.mxu0 0.0
      %1392 = vmatpush1.msra.mxu0 0.0
      %1393 = vmatprep.subr.mxu0 0.0
      %1394 = vmatpush1.msra.mxu0 0.0
      %1395 = vmatprep.subr.mxu0 0.0
      %1396 = vmatpush1.msra.mxu0 0.0
      %1397 = vmatprep.subr.mxu0 0.0
      %1398 = vmatpush1.msra.mxu0 0.0
      %1399 = vmatprep.subr.mxu0 0.0
      %1400 = vmatpush1.msra.mxu0 0.0
      %1401 = vmatprep.subr.mxu0 0.0
      %1402 = vmatpush1.msra.mxu0 0.0
      %1403 = vmatprep.subr.mxu0 0.0
      %1404 = vmatpush1.msra.mxu0 0.0
      %1405 = vmatprep.subr.mxu0 0.0
      %1406 = vmatpush1.msra.mxu0 0.0
      %1407 = vmatprep.subr.mxu0 0.0
      %1408 = vmatpush1.msra.mxu0 0.0
      %1409 = vmatprep.subr.mxu0 0.0
      %1410 = vmatpush1.msra.mxu0 0.0
      %1411 = vmatprep.subr.mxu0 0.0
      %1412 = vmatpush1.msra.mxu0 0.0
      %1413 = vmatprep.subr.mxu0 0.0
      %1414 = vmatpush1.msra.mxu0 0.0
      %1415 = vmatprep.subr.mxu0 0.0
      %1416 = vmatpush1.msra.mxu0 0.0
      %1417 = vmatprep.subr.mxu0 0.0
      %1418 = vmatpush1.msra.mxu0 0.0
      %1419 = vmatprep.mubr.f32.mxu0 0.0
      %1420 = vmatmul.mubr.f32.gmra.mrb[0].mxu0 %v900
      %v1421 = vpop.f32.mrb[0].mxu0
      %v1422 = vadd.f32 0.0, %v1421
      %v1423 = vpop.f32.mrb[0].mxu0
      %1424 = vmatprep.mubr.f32.mxu0 0.0
      %1425 = vmatmul.mubr.f32.gmra.mrb[0].mxu0 %v903
      %v1426 = vpop.f32.mrb[0].mxu0
      %v1427 = vadd.f32 0.0, %v1426
      %v1428 = vpop.f32.mrb[0].mxu0
      %1429 = vdwg.mxu0
      %1430 = vmatprep.subr.mxu0 0.0
      %1431 = vmatpush1.msra.mxu0 %v771
      %1432 = vmatprep.subr.mxu0 0.0
      %1433 = vmatpush1.msra.mxu0 %v776
      %1434 = vmatprep.subr.mxu0 0.0
      %1435 = vmatpush1.msra.mxu0 0.0
      %1436 = vmatprep.subr.mxu0 0.0
      %1437 = vmatpush1.msra.mxu0 0.0
      %1438 = vmatprep.subr.mxu0 0.0
      %1439 = vmatpush1.msra.mxu0 0.0
      %1440 = vmatprep.subr.mxu0 0.0
      %1441 = vmatpush1.msra.mxu0 0.0
      %1442 = vmatprep.subr.mxu0 0.0
      %1443 = vmatpush1.msra.mxu0 0.0
      %1444 = vmatprep.subr.mxu0 0.0
      %1445 = vmatpush1.msra.mxu0 0.0
      %1446 = vmatprep.subr.mxu0 0.0
      %1447 = vmatpush1.msra.mxu0 0.0
      %1448 = vmatprep.subr.mxu0 0.0
      %1449 = vmatpush1.msra.mxu0 0.0
      %1450 = vmatprep.subr.mxu0 0.0
      %1451 = vmatpush1.msra.mxu0 0.0
      %1452 = vmatprep.subr.mxu0 0.0
      %1453 = vmatpush1.msra.mxu0 0.0
      %1454 = vmatprep.subr.mxu0 0.0
      %1455 = vmatpush1.msra.mxu0 0.0
      %1456 = vmatprep.subr.mxu0 0.0
      %1457 = vmatpush1.msra.mxu0 0.0
      %1458 = vmatprep.subr.mxu0 0.0
      %1459 = vmatpush1.msra.mxu0 0.0
      %1460 = vmatprep.subr.mxu0 0.0
      %1461 = vmatpush1.msra.mxu0 0.0
      %1462 = vmatprep.subr.mxu0 0.0
      %1463 = vmatpush1.msra.mxu0 0.0
      %1464 = vmatprep.subr.mxu0 0.0
      %1465 = vmatpush1.msra.mxu0 0.0
      %1466 = vmatprep.subr.mxu0 0.0
      %1467 = vmatpush1.msra.mxu0 0.0
      %1468 = vmatprep.subr.mxu0 0.0
      %1469 = vmatpush1.msra.mxu0 0.0
      %1470 = vmatprep.subr.mxu0 0.0
      %1471 = vmatpush1.msra.mxu0 0.0
      %1472 = vmatprep.subr.mxu0 0.0
      %1473 = vmatpush1.msra.mxu0 0.0
      %1474 = vmatprep.subr.mxu0 0.0
      %1475 = vmatpush1.msra.mxu0 0.0
      %1476 = vmatprep.subr.mxu0 0.0
      %1477 = vmatpush1.msra.mxu0 0.0
      %1478 = vmatprep.subr.mxu0 0.0
      %1479 = vmatpush1.msra.mxu0 0.0
      %1480 = vmatprep.subr.mxu0 0.0
      %1481 = vmatpush1.msra.mxu0 0.0
      %1482 = vmatprep.subr.mxu0 0.0
      %1483 = vmatpush1.msra.mxu0 0.0
      %1484 = vmatprep.subr.mxu0 0.0
      %1485 = vmatpush1.msra.mxu0 0.0
      %1486 = vmatprep.subr.mxu0 0.0
      %1487 = vmatpush1.msra.mxu0 0.0
      %1488 = vmatprep.subr.mxu0 0.0
      %1489 = vmatpush1.msra.mxu0 0.0
      %1490 = vmatprep.subr.mxu0 0.0
      %1491 = vmatpush1.msra.mxu0 0.0
      %1492 = vmatprep.subr.mxu0 0.0
      %1493 = vmatpush1.msra.mxu0 0.0
      %1494 = vmatprep.mubr.f32.mxu0 0.0
      %1495 = vmatmul.mubr.f32.gmra.mrb[0].mxu0 %v900
      %v1496 = vpop.f32.mrb[0].mxu0
      %v1497 = vadd.f32 0.0, %v1496
      %v1498 = vpop.f32.mrb[0].mxu0
      %1499 = vmatprep.mubr.f32.mxu0 0.0
      %1500 = vmatmul.mubr.f32.gmra.mrb[0].mxu0 %v903
      %v1501 = vpop.f32.mrb[0].mxu0
      %v1502 = vadd.f32 0.0, %v1501
      %v1503 = vpop.f32.mrb[0].mxu0
      %1504 = vdwg.mxu0
      %1505 = vmatprep.subr.mxu0 0.0
      %1506 = vmatpush1.msra.mxu0 %v781
      %1507 = vmatprep.subr.mxu0 0.0
      %1508 = vmatpush1.msra.mxu0 %v786
      %1509 = vmatprep.subr.mxu0 0.0
      %1510 = vmatpush1.msra.mxu0 0.0
      %1511 = vmatprep.subr.mxu0 0.0
      %1512 = vmatpush1.msra.mxu0 0.0
      %1513 = vmatprep.subr.mxu0 0.0
      %1514 = vmatpush1.msra.mxu0 0.0
      %1515 = vmatprep.subr.mxu0 0.0
      %1516 = vmatpush1.msra.mxu0 0.0
      %1517 = vmatprep.subr.mxu0 0.0
      %1518 = vmatpush1.msra.mxu0 0.0
      %1519 = vmatprep.subr.mxu0 0.0
      %1520 = vmatpush1.msra.mxu0 0.0
      %1521 = vmatprep.subr.mxu0 0.0
      %1522 = vmatpush1.msra.mxu0 0.0
      %1523 = vmatprep.subr.mxu0 0.0
      %1524 = vmatpush1.msra.mxu0 0.0
      %1525 = vmatprep.subr.mxu0 0.0
      %1526 = vmatpush1.msra.mxu0 0.0
      %1527 = vmatprep.subr.mxu0 0.0
      %1528 = vmatpush1.msra.mxu0 0.0
      %1529 = vmatprep.subr.mxu0 0.0
      %1530 = vmatpush1.msra.mxu0 0.0
      %1531 = vmatprep.subr.mxu0 0.0
      %1532 = vmatpush1.msra.mxu0 0.0
      %1533 = vmatprep.subr.mxu0 0.0
      %1534 = vmatpush1.msra.mxu0 0.0
      %1535 = vmatprep.subr.mxu0 0.0
      %1536 = vmatpush1.msra.mxu0 0.0
      %1537 = vmatprep.subr.mxu0 0.0
      %1538 = vmatpush1.msra.mxu0 0.0
      %1539 = vmatprep.subr.mxu0 0.0
      %1540 = vmatpush1.msra.mxu0 0.0
      %1541 = vmatprep.subr.mxu0 0.0
      %1542 = vmatpush1.msra.mxu0 0.0
      %1543 = vmatprep.subr.mxu0 0.0
      %1544 = vmatpush1.msra.mxu0 0.0
      %1545 = vmatprep.subr.mxu0 0.0
      %1546 = vmatpush1.msra.mxu0 0.0
      %1547 = vmatprep.subr.mxu0 0.0
      %1548 = vmatpush1.msra.mxu0 0.0
      %1549 = vmatprep.subr.mxu0 0.0
      %1550 = vmatpush1.msra.mxu0 0.0
      %1551 = vmatprep.subr.mxu0 0.0
      %1552 = vmatpush1.msra.mxu0 0.0
      %1553 = vmatprep.subr.mxu0 0.0
      %1554 = vmatpush1.msra.mxu0 0.0
      %1555 = vmatprep.subr.mxu0 0.0
      %1556 = vmatpush1.msra.mxu0 0.0
      %1557 = vmatprep.subr.mxu0 0.0
      %1558 = vmatpush1.msra.mxu0 0.0
      %1559 = vmatprep.subr.mxu0 0.0
      %1560 = vmatpush1.msra.mxu0 0.0
      %1561 = vmatprep.subr.mxu0 0.0
      %1562 = vmatpush1.msra.mxu0 0.0
      %1563 = vmatprep.subr.mxu0 0.0
      %1564 = vmatpush1.msra.mxu0 0.0
      %1565 = vmatprep.subr.mxu0 0.0
      %1566 = vmatpush1.msra.mxu0 0.0
      %1567 = vmatprep.subr.mxu0 0.0
      %1568 = vmatpush1.msra.mxu0 0.0
      %1569 = vmatprep.mubr.f32.mxu0 0.0
      %1570 = vmatmul.mubr.f32.gmra.mrb[0].mxu0 %v900
      %v1571 = vpop.f32.mrb[0].mxu0
      %v1572 = vadd.f32 0.0, %v1571
      %v1573 = vpop.f32.mrb[0].mxu0
      %1574 = vmatprep.mubr.f32.mxu0 0.0
      %1575 = vmatmul.mubr.f32.gmra.mrb[0].mxu0 %v903
      %v1576 = vpop.f32.mrb[0].mxu0
      %v1577 = vadd.f32 0.0, %v1576
      %v1578 = vpop.f32.mrb[0].mxu0
      %1579 = vdwg.mxu0
      %1580 = vmatprep.subr.mxu0 0.0
      %1581 = vmatpush1.msra.mxu0 %v791
      %1582 = vmatprep.subr.mxu0 0.0
      %1583 = vmatpush1.msra.mxu0 %v796
      %1584 = vmatprep.subr.mxu0 0.0
      %1585 = vmatpush1.msra.mxu0 0.0
      %1586 = vmatprep.subr.mxu0 0.0
      %1587 = vmatpush1.msra.mxu0 0.0
      %1588 = vmatprep.subr.mxu0 0.0
      %1589 = vmatpush1.msra.mxu0 0.0
      %1590 = vmatprep.subr.mxu0 0.0
      %1591 = vmatpush1.msra.mxu0 0.0
      %1592 = vmatprep.subr.mxu0 0.0
      %1593 = vmatpush1.msra.mxu0 0.0
      %1594 = vmatprep.subr.mxu0 0.0
      %1595 = vmatpush1.msra.mxu0 0.0
      %1596 = vmatprep.subr.mxu0 0.0
      %1597 = vmatpush1.msra.mxu0 0.0
      %1598 = vmatprep.subr.mxu0 0.0
      %1599 = vmatpush1.msra.mxu0 0.0
      %1600 = vmatprep.subr.mxu0 0.0
      %1601 = vmatpush1.msra.mxu0 0.0
      %1602 = vmatprep.subr.mxu0 0.0
      %1603 = vmatpush1.msra.mxu0 0.0
      %1604 = vmatprep.subr.mxu0 0.0
      %1605 = vmatpush1.msra.mxu0 0.0
      %1606 = vmatprep.subr.mxu0 0.0
      %1607 = vmatpush1.msra.mxu0 0.0
      %1608 = vmatprep.subr.mxu0 0.0
      %1609 = vmatpush1.msra.mxu0 0.0
      %1610 = vmatprep.subr.mxu0 0.0
      %1611 = vmatpush1.msra.mxu0 0.0
      %1612 = vmatprep.subr.mxu0 0.0
      %1613 = vmatpush1.msra.mxu0 0.0
      %1614 = vmatprep.subr.mxu0 0.0
      %1615 = vmatpush1.msra.mxu0 0.0
      %1616 = vmatprep.subr.mxu0 0.0
      %1617 = vmatpush1.msra.mxu0 0.0
      %1618 = vmatprep.subr.mxu0 0.0
      %1619 = vmatpush1.msra.mxu0 0.0
      %1620 = vmatprep.subr.mxu0 0.0
      %1621 = vmatpush1.msra.mxu0 0.0
      %1622 = vmatprep.subr.mxu0 0.0
      %1623 = vmatpush1.msra.mxu0 0.0
      %1624 = vmatprep.subr.mxu0 0.0
      %1625 = vmatpush1.msra.mxu0 0.0
      %1626 = vmatprep.subr.mxu0 0.0
      %1627 = vmatpush1.msra.mxu0 0.0
      %1628 = vmatprep.subr.mxu0 0.0
      %1629 = vmatpush1.msra.mxu0 0.0
      %1630 = vmatprep.subr.mxu0 0.0
      %1631 = vmatpush1.msra.mxu0 0.0
      %1632 = vmatprep.subr.mxu0 0.0
      %1633 = vmatpush1.msra.mxu0 0.0
      %1634 = vmatprep.subr.mxu0 0.0
      %1635 = vmatpush1.msra.mxu0 0.0
      %1636 = vmatprep.subr.mxu0 0.0
      %1637 = vmatpush1.msra.mxu0 0.0
      %1638 = vmatprep.subr.mxu0 0.0
      %1639 = vmatpush1.msra.mxu0 0.0
      %1640 = vmatprep.subr.mxu0 0.0
      %1641 = vmatpush1.msra.mxu0 0.0
      %1642 = vmatprep.subr.mxu0 0.0
      %1643 = vmatpush1.msra.mxu0 0.0
      %1644 = vmatprep.mubr.f32.mxu0 0.0
      %1645 = vmatmul.mubr.f32.gmra.mrb[0].mxu0 %v900
      %v1646 = vpop.f32.mrb[0].mxu0
      %v1647 = vadd.f32 0.0, %v1646
      %v1648 = vpop.f32.mrb[0].mxu0
      %1649 = vmatprep.mubr.f32.mxu0 0.0
      %1650 = vmatmul.mubr.f32.gmra.mrb[0].mxu0 %v903
      %v1651 = vpop.f32.mrb[0].mxu0
      %v1652 = vadd.f32 0.0, %v1651
      %v1653 = vpop.f32.mrb[0].mxu0
      %1654 = vdwg.mxu0
      %1655 = vmatprep.subr.mxu0 0.0
      %1656 = vmatpush1.msra.mxu0 %v801
      %1657 = vmatprep.subr.mxu0 0.0
      %1658 = vmatpush1.msra.mxu0 %v806
      %1659 = vmatprep.subr.mxu0 0.0
      %1660 = vmatpush1.msra.mxu0 0.0
      %1661 = vmatprep.subr.mxu0 0.0
      %1662 = vmatpush1.msra.mxu0 0.0
      %1663 = vmatprep.subr.mxu0 0.0
      %1664 = vmatpush1.msra.mxu0 0.0
      %1665 = vmatprep.subr.mxu0 0.0
      %1666 = vmatpush1.msra.mxu0 0.0
      %1667 = vmatprep.subr.mxu0 0.0
      %1668 = vmatpush1.msra.mxu0 0.0
      %1669 = vmatprep.subr.mxu0 0.0
      %1670 = vmatpush1.msra.mxu0 0.0
      %1671 = vmatprep.subr.mxu0 0.0
      %1672 = vmatpush1.msra.mxu0 0.0
      %1673 = vmatprep.subr.mxu0 0.0
      %1674 = vmatpush1.msra.mxu0 0.0
      %1675 = vmatprep.subr.mxu0 0.0
      %1676 = vmatpush1.msra.mxu0 0.0
      %1677 = vmatprep.subr.mxu0 0.0
      %1678 = vmatpush1.msra.mxu0 0.0
      %1679 = vmatprep.subr.mxu0 0.0
      %1680 = vmatpush1.msra.mxu0 0.0
      %1681 = vmatprep.subr.mxu0 0.0
      %1682 = vmatpush1.msra.mxu0 0.0
      %1683 = vmatprep.subr.mxu0 0.0
      %1684 = vmatpush1.msra.mxu0 0.0
      %1685 = vmatprep.subr.mxu0 0.0
      %1686 = vmatpush1.msra.mxu0 0.0
      %1687 = vmatprep.subr.mxu0 0.0
      %1688 = vmatpush1.msra.mxu0 0.0
      %1689 = vmatprep.subr.mxu0 0.0
      %1690 = vmatpush1.msra.mxu0 0.0
      %1691 = vmatprep.subr.mxu0 0.0
      %1692 = vmatpush1.msra.mxu0 0.0
      %1693 = vmatprep.subr.mxu0 0.0
      %1694 = vmatpush1.msra.mxu0 0.0
      %1695 = vmatprep.subr.mxu0 0.0
      %1696 = vmatpush1.msra.mxu0 0.0
      %1697 = vmatprep.subr.mxu0 0.0
      %1698 = vmatpush1.msra.mxu0 0.0
      %1699 = vmatprep.subr.mxu0 0.0
      %1700 = vmatpush1.msra.mxu0 0.0
      %1701 = vmatprep.subr.mxu0 0.0
      %1702 = vmatpush1.msra.mxu0 0.0
      %1703 = vmatprep.subr.mxu0 0.0
      %1704 = vmatpush1.msra.mxu0 0.0
      %1705 = vmatprep.subr.mxu0 0.0
      %1706 = vmatpush1.msra.mxu0 0.0
      %1707 = vmatprep.subr.mxu0 0.0
      %1708 = vmatpush1.msra.mxu0 0.0
      %1709 = vmatprep.subr.mxu0 0.0
      %1710 = vmatpush1.msra.mxu0 0.0
      %1711 = vmatprep.subr.mxu0 0.0
      %1712 = vmatpush1.msra.mxu0 0.0
      %1713 = vmatprep.subr.mxu0 0.0
      %1714 = vmatpush1.msra.mxu0 0.0
      %1715 = vmatprep.subr.mxu0 0.0
      %1716 = vmatpush1.msra.mxu0 0.0
      %1717 = vmatprep.subr.mxu0 0.0
      %1718 = vmatpush1.msra.mxu0 0.0
      %1719 = vmatprep.mubr.f32.mxu0 0.0
      %1720 = vmatmul.mubr.f32.gmra.mrb[0].mxu0 %v900
      %v1721 = vpop.f32.mrb[0].mxu0
      %v1722 = vadd.f32 0.0, %v1721
      %v1723 = vpop.f32.mrb[0].mxu0
      %1724 = vmatprep.mubr.f32.mxu0 0.0
      %1725 = vmatmul.mubr.f32.gmra.mrb[0].mxu0 %v903
      %v1726 = vpop.f32.mrb[0].mxu0
      %v1727 = vadd.f32 0.0, %v1726
      %v1728 = vpop.f32.mrb[0].mxu0
      %1729 = vdwg.mxu0
      %1730 = vmatprep.subr.mxu0 0.0
      %1731 = vmatpush1.msra.mxu0 %v811
      %1732 = vmatprep.subr.mxu0 0.0
      %1733 = vmatpush1.msra.mxu0 %v816
      %1734 = vmatprep.subr.mxu0 0.0
      %1735 = vmatpush1.msra.mxu0 0.0
      %1736 = vmatprep.subr.mxu0 0.0
      %1737 = vmatpush1.msra.mxu0 0.0
      %1738 = vmatprep.subr.mxu0 0.0
      %1739 = vmatpush1.msra.mxu0 0.0
      %1740 = vmatprep.subr.mxu0 0.0
      %1741 = vmatpush1.msra.mxu0 0.0
      %1742 = vmatprep.subr.mxu0 0.0
      %1743 = vmatpush1.msra.mxu0 0.0
      %1744 = vmatprep.subr.mxu0 0.0
      %1745 = vmatpush1.msra.mxu0 0.0
      %1746 = vmatprep.subr.mxu0 0.0
      %1747 = vmatpush1.msra.mxu0 0.0
      %1748 = vmatprep.subr.mxu0 0.0
      %1749 = vmatpush1.msra.mxu0 0.0
      %1750 = vmatprep.subr.mxu0 0.0
      %1751 = vmatpush1.msra.mxu0 0.0
      %1752 = vmatprep.subr.mxu0 0.0
      %1753 = vmatpush1.msra.mxu0 0.0
      %1754 = vmatprep.subr.mxu0 0.0
      %1755 = vmatpush1.msra.mxu0 0.0
      %1756 = vmatprep.subr.mxu0 0.0
      %1757 = vmatpush1.msra.mxu0 0.0
      %1758 = vmatprep.subr.mxu0 0.0
      %1759 = vmatpush1.msra.mxu0 0.0
      %1760 = vmatprep.subr.mxu0 0.0
      %1761 = vmatpush1.msra.mxu0 0.0
      %1762 = vmatprep.subr.mxu0 0.0
      %1763 = vmatpush1.msra.mxu0 0.0
      %1764 = vmatprep.subr.mxu0 0.0
      %1765 = vmatpush1.msra.mxu0 0.0
      %1766 = vmatprep.subr.mxu0 0.0
      %1767 = vmatpush1.msra.mxu0 0.0
      %1768 = vmatprep.subr.mxu0 0.0
      %1769 = vmatpush1.msra.mxu0 0.0
      %1770 = vmatprep.subr.mxu0 0.0
      %1771 = vmatpush1.msra.mxu0 0.0
      %1772 = vmatprep.subr.mxu0 0.0
      %1773 = vmatpush1.msra.mxu0 0.0
      %1774 = vmatprep.subr.mxu0 0.0
      %1775 = vmatpush1.msra.mxu0 0.0
      %1776 = vmatprep.subr.mxu0 0.0
      %1777 = vmatpush1.msra.mxu0 0.0
      %1778 = vmatprep.subr.mxu0 0.0
      %1779 = vmatpush1.msra.mxu0 0.0
      %1780 = vmatprep.subr.mxu0 0.0
      %1781 = vmatpush1.msra.mxu0 0.0
      %1782 = vmatprep.subr.mxu0 0.0
      %1783 = vmatpush1.msra.mxu0 0.0
      %1784 = vmatprep.subr.mxu0 0.0
      %1785 = vmatpush1.msra.mxu0 0.0
      %1786 = vmatprep.subr.mxu0 0.0
      %1787 = vmatpush1.msra.mxu0 0.0
      %1788 = vmatprep.subr.mxu0 0.0
      %1789 = vmatpush1.msra.mxu0 0.0
      %1790 = vmatprep.subr.mxu0 0.0
      %1791 = vmatpush1.msra.mxu0 0.0
      %1792 = vmatprep.subr.mxu0 0.0
      %1793 = vmatpush1.msra.mxu0 0.0
      %1794 = vmatprep.mubr.f32.mxu0 0.0
      %1795 = vmatmul.mubr.f32.gmra.mrb[0].mxu0 %v900
      %v1796 = vpop.f32.mrb[0].mxu0
      %v1797 = vadd.f32 0.0, %v1796
      %v1798 = vpop.f32.mrb[0].mxu0
      %1799 = vmatprep.mubr.f32.mxu0 0.0
      %1800 = vmatmul.mubr.f32.gmra.mrb[0].mxu0 %v903
      %v1801 = vpop.f32.mrb[0].mxu0
      %v1802 = vadd.f32 0.0, %v1801
      %v1803 = vpop.f32.mrb[0].mxu0
      %1804 = vdwg.mxu0
      %1805 = vmatprep.subr.mxu0 0.0
      %1806 = vmatpush1.msra.mxu0 %v821
      %1807 = vmatprep.subr.mxu0 0.0
      %1808 = vmatpush1.msra.mxu0 %v826
      %1809 = vmatprep.subr.mxu0 0.0
      %1810 = vmatpush1.msra.mxu0 0.0
      %1811 = vmatprep.subr.mxu0 0.0
      %1812 = vmatpush1.msra.mxu0 0.0
      %1813 = vmatprep.subr.mxu0 0.0
      %1814 = vmatpush1.msra.mxu0 0.0
      %1815 = vmatprep.subr.mxu0 0.0
      %1816 = vmatpush1.msra.mxu0 0.0
      %1817 = vmatprep.subr.mxu0 0.0
      %1818 = vmatpush1.msra.mxu0 0.0
      %1819 = vmatprep.subr.mxu0 0.0
      %1820 = vmatpush1.msra.mxu0 0.0
      %1821 = vmatprep.subr.mxu0 0.0
      %1822 = vmatpush1.msra.mxu0 0.0
      %1823 = vmatprep.subr.mxu0 0.0
      %1824 = vmatpush1.msra.mxu0 0.0
      %1825 = vmatprep.subr.mxu0 0.0
      %1826 = vmatpush1.msra.mxu0 0.0
      %1827 = vmatprep.subr.mxu0 0.0
      %1828 = vmatpush1.msra.mxu0 0.0
      %1829 = vmatprep.subr.mxu0 0.0
      %1830 = vmatpush1.msra.mxu0 0.0
      %1831 = vmatprep.subr.mxu0 0.0
      %1832 = vmatpush1.msra.mxu0 0.0
      %1833 = vmatprep.subr.mxu0 0.0
      %1834 = vmatpush1.msra.mxu0 0.0
      %1835 = vmatprep.subr.mxu0 0.0
      %1836 = vmatpush1.msra.mxu0 0.0
      %1837 = vmatprep.subr.mxu0 0.0
      %1838 = vmatpush1.msra.mxu0 0.0
      %1839 = vmatprep.subr.mxu0 0.0
      %1840 = vmatpush1.msra.mxu0 0.0
      %1841 = vmatprep.subr.mxu0 0.0
      %1842 = vmatpush1.msra.mxu0 0.0
      %1843 = vmatprep.subr.mxu0 0.0
      %1844 = vmatpush1.msra.mxu0 0.0
      %1845 = vmatprep.subr.mxu0 0.0
      %1846 = vmatpush1.msra.mxu0 0.0
      %1847 = vmatprep.subr.mxu0 0.0
      %1848 = vmatpush1.msra.mxu0 0.0
      %1849 = vmatprep.subr.mxu0 0.0
      %1850 = vmatpush1.msra.mxu0 0.0
      %1851 = vmatprep.subr.mxu0 0.0
      %1852 = vmatpush1.msra.mxu0 0.0
      %1853 = vmatprep.subr.mxu0 0.0
      %1854 = vmatpush1.msra.mxu0 0.0
      %1855 = vmatprep.subr.mxu0 0.0
      %1856 = vmatpush1.msra.mxu0 0.0
      %1857 = vmatprep.subr.mxu0 0.0
      %1858 = vmatpush1.msra.mxu0 0.0
      %1859 = vmatprep.subr.mxu0 0.0
      %1860 = vmatpush1.msra.mxu0 0.0
      %1861 = vmatprep.subr.mxu0 0.0
      %1862 = vmatpush1.msra.mxu0 0.0
      %1863 = vmatprep.subr.mxu0 0.0
      %1864 = vmatpush1.msra.mxu0 0.0
      %1865 = vmatprep.subr.mxu0 0.0
      %1866 = vmatpush1.msra.mxu0 0.0
      %1867 = vmatprep.subr.mxu0 0.0
      %1868 = vmatpush1.msra.mxu0 0.0
      %1869 = vmatprep.mubr.f32.mxu0 0.0
      %1870 = vmatmul.mubr.f32.gmra.mrb[0].mxu0 %v900
      %v1871 = vpop.f32.mrb[0].mxu0
      %v1872 = vadd.f32 0.0, %v1871
      %v1873 = vpop.f32.mrb[0].mxu0
      %1874 = vmatprep.mubr.f32.mxu0 0.0
      %1875 = vmatmul.mubr.f32.gmra.mrb[0].mxu0 %v903
      %v1876 = vpop.f32.mrb[0].mxu0
      %v1877 = vadd.f32 0.0, %v1876
      %v1878 = vpop.f32.mrb[0].mxu0
      %1879 = vdwg.mxu0
      %1880 = vmatprep.subr.mxu0 0.0
      %1881 = vmatpush1.msra.mxu0 %v831
      %1882 = vmatprep.subr.mxu0 0.0
      %1883 = vmatpush1.msra.mxu0 %v836
      %1884 = vmatprep.subr.mxu0 0.0
      %1885 = vmatpush1.msra.mxu0 0.0
      %1886 = vmatprep.subr.mxu0 0.0
      %1887 = vmatpush1.msra.mxu0 0.0
      %1888 = vmatprep.subr.mxu0 0.0
      %1889 = vmatpush1.msra.mxu0 0.0
      %1890 = vmatprep.subr.mxu0 0.0
      %1891 = vmatpush1.msra.mxu0 0.0
      %1892 = vmatprep.subr.mxu0 0.0
      %1893 = vmatpush1.msra.mxu0 0.0
      %1894 = vmatprep.subr.mxu0 0.0
      %1895 = vmatpush1.msra.mxu0 0.0
      %1896 = vmatprep.subr.mxu0 0.0
      %1897 = vmatpush1.msra.mxu0 0.0
      %1898 = vmatprep.subr.mxu0 0.0
      %1899 = vmatpush1.msra.mxu0 0.0
      %1900 = vmatprep.subr.mxu0 0.0
      %1901 = vmatpush1.msra.mxu0 0.0
      %1902 = vmatprep.subr.mxu0 0.0
      %1903 = vmatpush1.msra.mxu0 0.0
      %1904 = vmatprep.subr.mxu0 0.0
      %1905 = vmatpush1.msra.mxu0 0.0
      %1906 = vmatprep.subr.mxu0 0.0
      %1907 = vmatpush1.msra.mxu0 0.0
      %1908 = vmatprep.subr.mxu0 0.0
      %1909 = vmatpush1.msra.mxu0 0.0
      %1910 = vmatprep.subr.mxu0 0.0
      %1911 = vmatpush1.msra.mxu0 0.0
      %1912 = vmatprep.subr.mxu0 0.0
      %1913 = vmatpush1.msra.mxu0 0.0
      %1914 = vmatprep.subr.mxu0 0.0
      %1915 = vmatpush1.msra.mxu0 0.0
      %1916 = vmatprep.subr.mxu0 0.0
      %1917 = vmatpush1.msra.mxu0 0.0
      %1918 = vmatprep.subr.mxu0 0.0
      %1919 = vmatpush1.msra.mxu0 0.0
      %1920 = vmatprep.subr.mxu0 0.0
      %1921 = vmatpush1.msra.mxu0 0.0
      %1922 = vmatprep.subr.mxu0 0.0
      %1923 = vmatpush1.msra.mxu0 0.0
      %1924 = vmatprep.subr.mxu0 0.0
      %1925 = vmatpush1.msra.mxu0 0.0
      %1926 = vmatprep.subr.mxu0 0.0
      %1927 = vmatpush1.msra.mxu0 0.0
      %1928 = vmatprep.subr.mxu0 0.0
      %1929 = vmatpush1.msra.mxu0 0.0
      %1930 = vmatprep.subr.mxu0 0.0
      %1931 = vmatpush1.msra.mxu0 0.0
      %1932 = vmatprep.subr.mxu0 0.0
      %1933 = vmatpush1.msra.mxu0 0.0
      %1934 = vmatprep.subr.mxu0 0.0
      %1935 = vmatpush1.msra.mxu0 0.0
      %1936 = vmatprep.subr.mxu0 0.0
      %1937 = vmatpush1.msra.mxu0 0.0
      %1938 = vmatprep.subr.mxu0 0.0
      %1939 = vmatpush1.msra.mxu0 0.0
      %1940 = vmatprep.subr.mxu0 0.0
      %1941 = vmatpush1.msra.mxu0 0.0
      %1942 = vmatprep.subr.mxu0 0.0
      %1943 = vmatpush1.msra.mxu0 0.0
      %1944 = vmatprep.mubr.f32.mxu0 0.0
      %1945 = vmatmul.mubr.f32.gmra.mrb[0].mxu0 %v900
      %v1946 = vpop.f32.mrb[0].mxu0
      %v1947 = vadd.f32 0.0, %v1946
      %v1948 = vpop.f32.mrb[0].mxu0
      %1949 = vmatprep.mubr.f32.mxu0 0.0
      %1950 = vmatmul.mubr.f32.gmra.mrb[0].mxu0 %v903
      %v1951 = vpop.f32.mrb[0].mxu0
      %v1952 = vadd.f32 0.0, %v1951
      %v1953 = vpop.f32.mrb[0].mxu0
      %1954 = vdwg.mxu0
      %1955 = vmatprep.subr.mxu0 0.0
      %1956 = vmatpush1.msra.mxu0 %v841
      %1957 = vmatprep.subr.mxu0 0.0
      %1958 = vmatpush1.msra.mxu0 %v846
      %1959 = vmatprep.subr.mxu0 0.0
      %1960 = vmatpush1.msra.mxu0 0.0
      %1961 = vmatprep.subr.mxu0 0.0
      %1962 = vmatpush1.msra.mxu0 0.0
      %1963 = vmatprep.subr.mxu0 0.0
      %1964 = vmatpush1.msra.mxu0 0.0
      %1965 = vmatprep.subr.mxu0 0.0
      %1966 = vmatpush1.msra.mxu0 0.0
      %1967 = vmatprep.subr.mxu0 0.0
      %1968 = vmatpush1.msra.mxu0 0.0
      %1969 = vmatprep.subr.mxu0 0.0
      %1970 = vmatpush1.msra.mxu0 0.0
      %1971 = vmatprep.subr.mxu0 0.0
      %1972 = vmatpush1.msra.mxu0 0.0
      %1973 = vmatprep.subr.mxu0 0.0
      %1974 = vmatpush1.msra.mxu0 0.0
      %1975 = vmatprep.subr.mxu0 0.0
      %1976 = vmatpush1.msra.mxu0 0.0
      %1977 = vmatprep.subr.mxu0 0.0
      %1978 = vmatpush1.msra.mxu0 0.0
      %1979 = vmatprep.subr.mxu0 0.0
      %1980 = vmatpush1.msra.mxu0 0.0
      %1981 = vmatprep.subr.mxu0 0.0
      %1982 = vmatpush1.msra.mxu0 0.0
      %1983 = vmatprep.subr.mxu0 0.0
      %1984 = vmatpush1.msra.mxu0 0.0
      %1985 = vmatprep.subr.mxu0 0.0
      %1986 = vmatpush1.msra.mxu0 0.0
      %1987 = vmatprep.subr.mxu0 0.0
      %1988 = vmatpush1.msra.mxu0 0.0
      %1989 = vmatprep.subr.mxu0 0.0
      %1990 = vmatpush1.msra.mxu0 0.0
      %1991 = vmatprep.subr.mxu0 0.0
      %1992 = vmatpush1.msra.mxu0 0.0
      %1993 = vmatprep.subr.mxu0 0.0
      %1994 = vmatpush1.msra.mxu0 0.0
      %1995 = vmatprep.subr.mxu0 0.0
      %1996 = vmatpush1.msra.mxu0 0.0
      %1997 = vmatprep.subr.mxu0 0.0
      %1998 = vmatpush1.msra.mxu0 0.0
      %1999 = vmatprep.subr.mxu0 0.0
      %2000 = vmatpush1.msra.mxu0 0.0
      %2001 = vmatprep.subr.mxu0 0.0
      %2002 = vmatpush1.msra.mxu0 0.0
      %2003 = vmatprep.subr.mxu0 0.0
      %2004 = vmatpush1.msra.mxu0 0.0
      %2005 = vmatprep.subr.mxu0 0.0
      %2006 = vmatpush1.msra.mxu0 0.0
      %2007 = vmatprep.subr.mxu0 0.0
      %2008 = vmatpush1.msra.mxu0 0.0
      %2009 = vmatprep.subr.mxu0 0.0
      %2010 = vmatpush1.msra.mxu0 0.0
      %2011 = vmatprep.subr.mxu0 0.0
      %2012 = vmatpush1.msra.mxu0 0.0
      %2013 = vmatprep.subr.mxu0 0.0
      %2014 = vmatpush1.msra.mxu0 0.0
      %2015 = vmatprep.subr.mxu0 0.0
      %2016 = vmatpush1.msra.mxu0 0.0
      %2017 = vmatprep.subr.mxu0 0.0
      %2018 = vmatpush1.msra.mxu0 0.0
      %2019 = vmatprep.mubr.f32.mxu0 0.0
      %2020 = vmatmul.mubr.f32.gmra.mrb[0].mxu0 %v900
      %v2021 = vpop.f32.mrb[0].mxu0
      %v2022 = vadd.f32 0.0, %v2021
      %v2023 = vpop.f32.mrb[0].mxu0
      %2024 = vmatprep.mubr.f32.mxu0 0.0
      %2025 = vmatmul.mubr.f32.gmra.mrb[0].mxu0 %v903
      %v2026 = vpop.f32.mrb[0].mxu0
      %v2027 = vadd.f32 0.0, %v2026
      %v2028 = vpop.f32.mrb[0].mxu0
      %2029 = vdwg.mxu0
      %2030 = vmatprep.subr.mxu0 0.0
      %2031 = vmatpush1.msra.mxu0 %v851
      %2032 = vmatprep.subr.mxu0 0.0
      %2033 = vmatpush1.msra.mxu0 %v856
      %2034 = vmatprep.subr.mxu0 0.0
      %2035 = vmatpush1.msra.mxu0 0.0
      %2036 = vmatprep.subr.mxu0 0.0
      %2037 = vmatpush1.msra.mxu0 0.0
      %2038 = vmatprep.subr.mxu0 0.0
      %2039 = vmatpush1.msra.mxu0 0.0
      %2040 = vmatprep.subr.mxu0 0.0
      %2041 = vmatpush1.msra.mxu0 0.0
      %2042 = vmatprep.subr.mxu0 0.0
      %2043 = vmatpush1.msra.mxu0 0.0
      %2044 = vmatprep.subr.mxu0 0.0
      %2045 = vmatpush1.msra.mxu0 0.0
      %2046 = vmatprep.subr.mxu0 0.0
      %2047 = vmatpush1.msra.mxu0 0.0
      %2048 = vmatprep.subr.mxu0 0.0
      %2049 = vmatpush1.msra.mxu0 0.0
      %2050 = vmatprep.subr.mxu0 0.0
      %2051 = vmatpush1.msra.mxu0 0.0
      %2052 = vmatprep.subr.mxu0 0.0
      %2053 = vmatpush1.msra.mxu0 0.0
      %2054 = vmatprep.subr.mxu0 0.0
      %2055 = vmatpush1.msra.mxu0 0.0
      %2056 = vmatprep.subr.mxu0 0.0
      %2057 = vmatpush1.msra.mxu0 0.0
      %2058 = vmatprep.subr.mxu0 0.0
      %2059 = vmatpush1.msra.mxu0 0.0
      %2060 = vmatprep.subr.mxu0 0.0
      %2061 = vmatpush1.msra.mxu0 0.0
      %2062 = vmatprep.subr.mxu0 0.0
      %2063 = vmatpush1.msra.mxu0 0.0
      %2064 = vmatprep.subr.mxu0 0.0
      %2065 = vmatpush1.msra.mxu0 0.0
      %2066 = vmatprep.subr.mxu0 0.0
      %2067 = vmatpush1.msra.mxu0 0.0
      %2068 = vmatprep.subr.mxu0 0.0
      %2069 = vmatpush1.msra.mxu0 0.0
      %2070 = vmatprep.subr.mxu0 0.0
      %2071 = vmatpush1.msra.mxu0 0.0
      %2072 = vmatprep.subr.mxu0 0.0
      %2073 = vmatpush1.msra.mxu0 0.0
      %2074 = vmatprep.subr.mxu0 0.0
      %2075 = vmatpush1.msra.mxu0 0.0
      %2076 = vmatprep.subr.mxu0 0.0
      %2077 = vmatpush1.msra.mxu0 0.0
      %2078 = vmatprep.subr.mxu0 0.0
      %2079 = vmatpush1.msra.mxu0 0.0
      %2080 = vmatprep.subr.mxu0 0.0
      %2081 = vmatpush1.msra.mxu0 0.0
      %2082 = vmatprep.subr.mxu0 0.0
      %2083 = vmatpush1.msra.mxu0 0.0
      %2084 = vmatprep.subr.mxu0 0.0
      %2085 = vmatpush1.msra.mxu0 0.0
      %2086 = vmatprep.subr.mxu0 0.0
      %2087 = vmatpush1.msra.mxu0 0.0
      %2088 = vmatprep.subr.mxu0 0.0
      %2089 = vmatpush1.msra.mxu0 0.0
      %2090 = vmatprep.subr.mxu0 0.0
      %2091 = vmatpush1.msra.mxu0 0.0
      %2092 = vmatprep.subr.mxu0 0.0
      %2093 = vmatpush1.msra.mxu0 0.0
      %2094 = vmatprep.mubr.f32.mxu0 0.0
      %2095 = vmatmul.mubr.f32.gmra.mrb[0].mxu0 %v900
      %v2096 = vpop.f32.mrb[0].mxu0
      %v2097 = vadd.f32 0.0, %v2096
      %v2098 = vpop.f32.mrb[0].mxu0
      %2099 = vmatprep.mubr.f32.mxu0 0.0
      %2100 = vmatmul.mubr.f32.gmra.mrb[0].mxu0 %v903
      %v2101 = vpop.f32.mrb[0].mxu0
      %v2102 = vadd.f32 0.0, %v2101
      %v2103 = vpop.f32.mrb[0].mxu0
      %2104 = vdwg.mxu0
      %2105 = vmatprep.subr.mxu0 0.0
      %2106 = vmatpush1.msra.mxu0 %v861
      %2107 = vmatprep.subr.mxu0 0.0
      %2108 = vmatpush1.msra.mxu0 %v866
      %2109 = vmatprep.subr.mxu0 0.0
      %2110 = vmatpush1.msra.mxu0 0.0
      %2111 = vmatprep.subr.mxu0 0.0
      %2112 = vmatpush1.msra.mxu0 0.0
      %2113 = vmatprep.subr.mxu0 0.0
      %2114 = vmatpush1.msra.mxu0 0.0
      %2115 = vmatprep.subr.mxu0 0.0
      %2116 = vmatpush1.msra.mxu0 0.0
      %2117 = vmatprep.subr.mxu0 0.0
      %2118 = vmatpush1.msra.mxu0 0.0
      %2119 = vmatprep.subr.mxu0 0.0
      %2120 = vmatpush1.msra.mxu0 0.0
      %2121 = vmatprep.subr.mxu0 0.0
      %2122 = vmatpush1.msra.mxu0 0.0
      %2123 = vmatprep.subr.mxu0 0.0
      %2124 = vmatpush1.msra.mxu0 0.0
      %2125 = vmatprep.subr.mxu0 0.0
      %2126 = vmatpush1.msra.mxu0 0.0
      %2127 = vmatprep.subr.mxu0 0.0
      %2128 = vmatpush1.msra.mxu0 0.0
      %2129 = vmatprep.subr.mxu0 0.0
      %2130 = vmatpush1.msra.mxu0 0.0
      %2131 = vmatprep.subr.mxu0 0.0
      %2132 = vmatpush1.msra.mxu0 0.0
      %2133 = vmatprep.subr.mxu0 0.0
      %2134 = vmatpush1.msra.mxu0 0.0
      %2135 = vmatprep.subr.mxu0 0.0
      %2136 = vmatpush1.msra.mxu0 0.0
      %2137 = vmatprep.subr.mxu0 0.0
      %2138 = vmatpush1.msra.mxu0 0.0
      %2139 = vmatprep.subr.mxu0 0.0
      %2140 = vmatpush1.msra.mxu0 0.0
      %2141 = vmatprep.subr.mxu0 0.0
      %2142 = vmatpush1.msra.mxu0 0.0
      %2143 = vmatprep.subr.mxu0 0.0
      %2144 = vmatpush1.msra.mxu0 0.0
      %2145 = vmatprep.subr.mxu0 0.0
      %2146 = vmatpush1.msra.mxu0 0.0
      %2147 = vmatprep.subr.mxu0 0.0
      %2148 = vmatpush1.msra.mxu0 0.0
      %2149 = vmatprep.subr.mxu0 0.0
      %2150 = vmatpush1.msra.mxu0 0.0
      %2151 = vmatprep.subr.mxu0 0.0
      %2152 = vmatpush1.msra.mxu0 0.0
      %2153 = vmatprep.subr.mxu0 0.0
      %2154 = vmatpush1.msra.mxu0 0.0
      %2155 = vmatprep.subr.mxu0 0.0
      %2156 = vmatpush1.msra.mxu0 0.0
      %2157 = vmatprep.subr.mxu0 0.0
      %2158 = vmatpush1.msra.mxu0 0.0
      %2159 = vmatprep.subr.mxu0 0.0
      %2160 = vmatpush1.msra.mxu0 0.0
      %2161 = vmatprep.subr.mxu0 0.0
      %2162 = vmatpush1.msra.mxu0 0.0
      %2163 = vmatprep.subr.mxu0 0.0
      %2164 = vmatpush1.msra.mxu0 0.0
      %2165 = vmatprep.subr.mxu0 0.0
      %2166 = vmatpush1.msra.mxu0 0.0
      %2167 = vmatprep.subr.mxu0 0.0
      %2168 = vmatpush1.msra.mxu0 0.0
      %2169 = vmatprep.mubr.f32.mxu0 0.0
      %2170 = vmatmul.mubr.f32.gmra.mrb[0].mxu0 %v900
      %v2171 = vpop.f32.mrb[0].mxu0
      %v2172 = vadd.f32 0.0, %v2171
      %v2173 = vpop.f32.mrb[0].mxu0
      %2174 = vmatprep.mubr.f32.mxu0 0.0
      %2175 = vmatmul.mubr.f32.gmra.mrb[0].mxu0 %v903
      %v2176 = vpop.f32.mrb[0].mxu0
      %v2177 = vadd.f32 0.0, %v2176
      %v2178 = vpop.f32.mrb[0].mxu0
      %2179 = vdwg.mxu0
      %2180 = vmatprep.subr.mxu0 0.0
      %2181 = vmatpush1.msra.mxu0 %v871
      %2182 = vmatprep.subr.mxu0 0.0
      %2183 = vmatpush1.msra.mxu0 %v876
      %2184 = vmatprep.subr.mxu0 0.0
      %2185 = vmatpush1.msra.mxu0 0.0
      %2186 = vmatprep.subr.mxu0 0.0
      %2187 = vmatpush1.msra.mxu0 0.0
      %2188 = vmatprep.subr.mxu0 0.0
      %2189 = vmatpush1.msra.mxu0 0.0
      %2190 = vmatprep.subr.mxu0 0.0
      %2191 = vmatpush1.msra.mxu0 0.0
      %2192 = vmatprep.subr.mxu0 0.0
      %2193 = vmatpush1.msra.mxu0 0.0
      %2194 = vmatprep.subr.mxu0 0.0
      %2195 = vmatpush1.msra.mxu0 0.0
      %2196 = vmatprep.subr.mxu0 0.0
      %2197 = vmatpush1.msra.mxu0 0.0
      %2198 = vmatprep.subr.mxu0 0.0
      %2199 = vmatpush1.msra.mxu0 0.0
      %2200 = vmatprep.subr.mxu0 0.0
      %2201 = vmatpush1.msra.mxu0 0.0
      %2202 = vmatprep.subr.mxu0 0.0
      %2203 = vmatpush1.msra.mxu0 0.0
      %2204 = vmatprep.subr.mxu0 0.0
      %2205 = vmatpush1.msra.mxu0 0.0
      %2206 = vmatprep.subr.mxu0 0.0
      %2207 = vmatpush1.msra.mxu0 0.0
      %2208 = vmatprep.subr.mxu0 0.0
      %2209 = vmatpush1.msra.mxu0 0.0
      %2210 = vmatprep.subr.mxu0 0.0
      %2211 = vmatpush1.msra.mxu0 0.0
      %2212 = vmatprep.subr.mxu0 0.0
      %2213 = vmatpush1.msra.mxu0 0.0
      %2214 = vmatprep.subr.mxu0 0.0
      %2215 = vmatpush1.msra.mxu0 0.0
      %2216 = vmatprep.subr.mxu0 0.0
      %2217 = vmatpush1.msra.mxu0 0.0
      %2218 = vmatprep.subr.mxu0 0.0
      %2219 = vmatpush1.msra.mxu0 0.0
      %2220 = vmatprep.subr.mxu0 0.0
      %2221 = vmatpush1.msra.mxu0 0.0
      %2222 = vmatprep.subr.mxu0 0.0
      %2223 = vmatpush1.msra.mxu0 0.0
      %2224 = vmatprep.subr.mxu0 0.0
      %2225 = vmatpush1.msra.mxu0 0.0
      %2226 = vmatprep.subr.mxu0 0.0
      %2227 = vmatpush1.msra.mxu0 0.0
      %2228 = vmatprep.subr.mxu0 0.0
      %2229 = vmatpush1.msra.mxu0 0.0
      %2230 = vmatprep.subr.mxu0 0.0
      %2231 = vmatpush1.msra.mxu0 0.0
      %2232 = vmatprep.subr.mxu0 0.0
      %2233 = vmatpush1.msra.mxu0 0.0
      %2234 = vmatprep.subr.mxu0 0.0
      %2235 = vmatpush1.msra.mxu0 0.0
      %2236 = vmatprep.subr.mxu0 0.0
      %2237 = vmatpush1.msra.mxu0 0.0
      %2238 = vmatprep.subr.mxu0 0.0
      %2239 = vmatpush1.msra.mxu0 0.0
      %2240 = vmatprep.subr.mxu0 0.0
      %2241 = vmatpush1.msra.mxu0 0.0
      %2242 = vmatprep.subr.mxu0 0.0
      %2243 = vmatpush1.msra.mxu0 0.0
      %2244 = vmatprep.mubr.f32.mxu0 0.0
      %2245 = vmatmul.mubr.f32.gmra.mrb[0].mxu0 %v900
      %v2246 = vpop.f32.mrb[0].mxu0
      %v2247 = vadd.f32 0.0, %v2246
      %v2248 = vpop.f32.mrb[0].mxu0
      %2249 = vmatprep.mubr.f32.mxu0 0.0
      %2250 = vmatmul.mubr.f32.gmra.mrb[0].mxu0 %v903
      %v2251 = vpop.f32.mrb[0].mxu0
      %v2252 = vadd.f32 0.0, %v2251
      %v2253 = vpop.f32.mrb[0].mxu0
      %2254 = vdwg.mxu0
      %2255 = vmatprep.subr.mxu0 0.0
      %2256 = vmatpush1.msra.mxu0 %v881
      %2257 = vmatprep.subr.mxu0 0.0
      %2258 = vmatpush1.msra.mxu0 %v886
      %2259 = vmatprep.subr.mxu0 0.0
      %2260 = vmatpush1.msra.mxu0 0.0
      %2261 = vmatprep.subr.mxu0 0.0
      %2262 = vmatpush1.msra.mxu0 0.0
      %2263 = vmatprep.subr.mxu0 0.0
      %2264 = vmatpush1.msra.mxu0 0.0
      %2265 = vmatprep.subr.mxu0 0.0
      %2266 = vmatpush1.msra.mxu0 0.0
      %2267 = vmatprep.subr.mxu0 0.0
      %2268 = vmatpush1.msra.mxu0 0.0
      %2269 = vmatprep.subr.mxu0 0.0
      %2270 = vmatpush1.msra.mxu0 0.0
      %2271 = vmatprep.subr.mxu0 0.0
      %2272 = vmatpush1.msra.mxu0 0.0
      %2273 = vmatprep.subr.mxu0 0.0
      %2274 = vmatpush1.msra.mxu0 0.0
      %2275 = vmatprep.subr.mxu0 0.0
      %2276 = vmatpush1.msra.mxu0 0.0
      %2277 = vmatprep.subr.mxu0 0.0
      %2278 = vmatpush1.msra.mxu0 0.0
      %2279 = vmatprep.subr.mxu0 0.0
      %2280 = vmatpush1.msra.mxu0 0.0
      %2281 = vmatprep.subr.mxu0 0.0
      %2282 = vmatpush1.msra.mxu0 0.0
      %2283 = vmatprep.subr.mxu0 0.0
      %2284 = vmatpush1.msra.mxu0 0.0
      %2285 = vmatprep.subr.mxu0 0.0
      %2286 = vmatpush1.msra.mxu0 0.0
      %2287 = vmatprep.subr.mxu0 0.0
      %2288 = vmatpush1.msra.mxu0 0.0
      %2289 = vmatprep.subr.mxu0 0.0
      %2290 = vmatpush1.msra.mxu0 0.0
      %2291 = vmatprep.subr.mxu0 0.0
      %2292 = vmatpush1.msra.mxu0 0.0
      %2293 = vmatprep.subr.mxu0 0.0
      %2294 = vmatpush1.msra.mxu0 0.0
      %2295 = vmatprep.subr.mxu0 0.0
      %2296 = vmatpush1.msra.mxu0 0.0
      %2297 = vmatprep.subr.mxu0 0.0
      %2298 = vmatpush1.msra.mxu0 0.0
      %2299 = vmatprep.subr.mxu0 0.0
      %2300 = vmatpush1.msra.mxu0 0.0
      %2301 = vmatprep.subr.mxu0 0.0
      %2302 = vmatpush1.msra.mxu0 0.0
      %2303 = vmatprep.subr.mxu0 0.0
      %2304 = vmatpush1.msra.mxu0 0.0
      %2305 = vmatprep.subr.mxu0 0.0
      %2306 = vmatpush1.msra.mxu0 0.0
      %2307 = vmatprep.subr.mxu0 0.0
      %2308 = vmatpush1.msra.mxu0 0.0
      %2309 = vmatprep.subr.mxu0 0.0
      %2310 = vmatpush1.msra.mxu0 0.0
      %2311 = vmatprep.subr.mxu0 0.0
      %2312 = vmatpush1.msra.mxu0 0.0
      %2313 = vmatprep.subr.mxu0 0.0
      %2314 = vmatpush1.msra.mxu0 0.0
      %2315 = vmatprep.subr.mxu0 0.0
      %2316 = vmatpush1.msra.mxu0 0.0
      %2317 = vmatprep.subr.mxu0 0.0
      %2318 = vmatpush1.msra.mxu0 0.0
      %2319 = vmatprep.mubr.f32.mxu0 0.0
      %2320 = vmatmul.mubr.f32.gmra.mrb[0].mxu0 %v900
      %v2321 = vpop.f32.mrb[0].mxu0
      %v2322 = vadd.f32 0.0, %v2321
      %v2323 = vpop.f32.mrb[0].mxu0
      %2324 = vmatprep.mubr.f32.mxu0 0.0
      %2325 = vmatmul.mubr.f32.gmra.mrb[0].mxu0 %v903
      %v2326 = vpop.f32.mrb[0].mxu0
      %v2327 = vadd.f32 0.0, %v2326
      %v2328 = vpop.f32.mrb[0].mxu0
      %2329 = vdwg.mxu0
      %2330 = vmatprep.subr.mxu0 0.0
      %2331 = vmatpush1.msra.mxu0 %v891
      %2332 = vmatprep.subr.mxu0 0.0
      %2333 = vmatpush1.msra.mxu0 %v896
      %2334 = vmatprep.subr.mxu0 0.0
      %2335 = vmatpush1.msra.mxu0 0.0
      %2336 = vmatprep.subr.mxu0 0.0
      %2337 = vmatpush1.msra.mxu0 0.0
      %2338 = vmatprep.subr.mxu0 0.0
      %2339 = vmatpush1.msra.mxu0 0.0
      %2340 = vmatprep.subr.mxu0 0.0
      %2341 = vmatpush1.msra.mxu0 0.0
      %2342 = vmatprep.subr.mxu0 0.0
      %2343 = vmatpush1.msra.mxu0 0.0
      %2344 = vmatprep.subr.mxu0 0.0
      %2345 = vmatpush1.msra.mxu0 0.0
      %2346 = vmatprep.subr.mxu0 0.0
      %2347 = vmatpush1.msra.mxu0 0.0
      %2348 = vmatprep.subr.mxu0 0.0
      %2349 = vmatpush1.msra.mxu0 0.0
      %2350 = vmatprep.subr.mxu0 0.0
      %2351 = vmatpush1.msra.mxu0 0.0
      %2352 = vmatprep.subr.mxu0 0.0
      %2353 = vmatpush1.msra.mxu0 0.0
      %2354 = vmatprep.subr.mxu0 0.0
      %2355 = vmatpush1.msra.mxu0 0.0
      %2356 = vmatprep.subr.mxu0 0.0
      %2357 = vmatpush1.msra.mxu0 0.0
      %2358 = vmatprep.subr.mxu0 0.0
      %2359 = vmatpush1.msra.mxu0 0.0
      %2360 = vmatprep.subr.mxu0 0.0
      %2361 = vmatpush1.msra.mxu0 0.0
      %2362 = vmatprep.subr.mxu0 0.0
      %2363 = vmatpush1.msra.mxu0 0.0
      %2364 = vmatprep.subr.mxu0 0.0
      %2365 = vmatpush1.msra.mxu0 0.0
      %2366 = vmatprep.subr.mxu0 0.0
      %2367 = vmatpush1.msra.mxu0 0.0
      %2368 = vmatprep.subr.mxu0 0.0
      %2369 = vmatpush1.msra.mxu0 0.0
      %2370 = vmatprep.subr.mxu0 0.0
      %2371 = vmatpush1.msra.mxu0 0.0
      %2372 = vmatprep.subr.mxu0 0.0
      %2373 = vmatpush1.msra.mxu0 0.0
      %2374 = vmatprep.subr.mxu0 0.0
      %2375 = vmatpush1.msra.mxu0 0.0
      %2376 = vmatprep.subr.mxu0 0.0
      %2377 = vmatpush1.msra.mxu0 0.0
      %2378 = vmatprep.subr.mxu0 0.0
      %2379 = vmatpush1.msra.mxu0 0.0
      %2380 = vmatprep.subr.mxu0 0.0
      %2381 = vmatpush1.msra.mxu0 0.0
      %2382 = vmatprep.subr.mxu0 0.0
      %2383 = vmatpush1.msra.mxu0 0.0
      %2384 = vmatprep.subr.mxu0 0.0
      %2385 = vmatpush1.msra.mxu0 0.0
      %2386 = vmatprep.subr.mxu0 0.0
      %2387 = vmatpush1.msra.mxu0 0.0
      %2388 = vmatprep.subr.mxu0 0.0
      %2389 = vmatpush1.msra.mxu0 0.0
      %2390 = vmatprep.subr.mxu0 0.0
      %2391 = vmatpush1.msra.mxu0 0.0
      %2392 = vmatprep.subr.mxu0 0.0
      %2393 = vmatpush1.msra.mxu0 0.0
      %2394 = vmatprep.mubr.f32.mxu0 0.0
      %2395 = vmatmul.mubr.f32.gmra.mrb[0].mxu0 %v900
      %v2396 = vpop.f32.mrb[0].mxu0
      %v2397 = vadd.f32 0.0, %v2396
      %v2398 = vpop.f32.mrb[0].mxu0
      %2399 = vmatprep.mubr.f32.mxu0 0.0
      %2400 = vmatmul.mubr.f32.gmra.mrb[0].mxu0 %v903
      %v2401 = vpop.f32.mrb[0].mxu0
      %v2402 = vadd.f32 0.0, %v2401
      %v2403 = vpop.f32.mrb[0].mxu0
      %2404 = vdwg.mxu0
      %v2405 = vmul.f32 %v972, %v972
      %v2406 = vmul.f32 %v977, %v977
      %v2407 = vmul.f32 %v1047, %v1047
      %v2408 = vmul.f32 %v1052, %v1052
      %v2409 = vmul.f32 %v1122, %v1122
      %v2410 = vmul.f32 %v1127, %v1127
      %v2411 = vmul.f32 %v1197, %v1197
      %v2412 = vmul.f32 %v1202, %v1202
      %v2413 = vmul.f32 %v1272, %v1272
      %v2414 = vmul.f32 %v1277, %v1277
      %v2415 = vmul.f32 %v1347, %v1347
      %v2416 = vmul.f32 %v1352, %v1352
      %v2417 = vmul.f32 %v1422, %v1422
      %v2418 = vmul.f32 %v1427, %v1427
      %v2419 = vmul.f32 %v1497, %v1497
      %v2420 = vmul.f32 %v1502, %v1502
      %v2421 = vmul.f32 %v972, %v1272
      %v2422 = vmul.f32 %v977, %v1277
      %v2423 = vmul.f32 %v1047, %v1347
      %v2424 = vmul.f32 %v1052, %v1352
      %v2425 = vmul.f32 %v1122, %v1422
      %v2426 = vmul.f32 %v1127, %v1427
      %v2427 = vmul.f32 %v1197, %v1497
      %v2428 = vmul.f32 %v1202, %v1502
      %v2429 = vmul.f32 %v2421, 2.0
      %v2430 = vmul.f32 %v2422, 2.0
      %v2431 = vmul.f32 %v2423, 2.0
      %v2432 = vmul.f32 %v2424, 2.0
      %v2433 = vmul.f32 %v2425, 2.0
      %v2434 = vmul.f32 %v2426, 2.0
      %v2435 = vmul.f32 %v2427, 2.0
      %v2436 = vmul.f32 %v2428, 2.0
      %v2437 = vadd.f32 %v2429, 0.0001
      %v2438 = vadd.f32 %v2430, 0.0001
      %v2439 = vadd.f32 %v2431, 0.0001
      %v2440 = vadd.f32 %v2432, 0.0001
      %v2441 = vadd.f32 %v2433, 0.0001
      %v2442 = vadd.f32 %v2434, 0.0001
      %v2443 = vadd.f32 %v2435, 0.0001
      %v2444 = vadd.f32 %v2436, 0.0001
      %v2445 = vsub.f32 %v2172, %v2421
      %v2446 = vsub.f32 %v2177, %v2422
      %v2447 = vsub.f32 %v2247, %v2423
      %v2448 = vsub.f32 %v2252, %v2424
      %v2449 = vsub.f32 %v2322, %v2425
      %v2450 = vsub.f32 %v2327, %v2426
      %v2451 = vsub.f32 %v2397, %v2427
      %v2452 = vsub.f32 %v2402, %v2428
      %v2453 = vmul.f32 %v2445, 2.0
      %v2454 = vmul.f32 %v2446, 2.0
      %v2455 = vmul.f32 %v2447, 2.0
      %v2456 = vmul.f32 %v2448, 2.0
      %v2457 = vmul.f32 %v2449, 2.0
      %v2458 = vmul.f32 %v2450, 2.0
      %v2459 = vmul.f32 %v2451, 2.0
      %v2460 = vmul.f32 %v2452, 2.0
      %v2461 = vadd.f32 %v2453, 0.0009
      %v2462 = vadd.f32 %v2454, 0.0009
      %v2463 = vadd.f32 %v2455, 0.0009
      %v2464 = vadd.f32 %v2456, 0.0009
      %v2465 = vadd.f32 %v2457, 0.0009
      %v2466 = vadd.f32 %v2458, 0.0009
      %v2467 = vadd.f32 %v2459, 0.0009
      %v2468 = vadd.f32 %v2460, 0.0009
      %v2469 = vmul.f32 %v2437, %v2461
      %v2470 = vmul.f32 %v2438, %v2462
      %v2471 = vmul.f32 %v2439, %v2463
      %v2472 = vmul.f32 %v2440, %v2464
      %v2473 = vmul.f32 %v2441, %v2465
      %v2474 = vmul.f32 %v2442, %v2466
      %v2475 = vmul.f32 %v2443, %v2467
      %v2476 = vmul.f32 %v2444, %v2468
      %v2477 = vadd.f32 %v2405, %v2413
      %v2478 = vadd.f32 %v2406, %v2414
      %v2479 = vadd.f32 %v2407, %v2415
      %v2480 = vadd.f32 %v2408, %v2416
      %v2481 = vadd.f32 %v2409, %v2417
      %v2482 = vadd.f32 %v2410, %v2418
      %v2483 = vadd.f32 %v2411, %v2419
      %v2484 = vadd.f32 %v2412, %v2420
      %v2485 = vadd.f32 %v2477, 0.0001
      %v2486 = vadd.f32 %v2478, 0.0001
      %v2487 = vadd.f32 %v2479, 0.0001
      %v2488 = vadd.f32 %v2480, 0.0001
      %v2489 = vadd.f32 %v2481, 0.0001
      %v2490 = vadd.f32 %v2482, 0.0001
      %v2491 = vadd.f32 %v2483, 0.0001
      %v2492 = vadd.f32 %v2484, 0.0001
      %v2493 = vsub.f32 %v1572, %v2405
      %v2494 = vsub.f32 %v1577, %v2406
      %v2495 = vsub.f32 %v1647, %v2407
      %v2496 = vsub.f32 %v1652, %v2408
      %v2497 = vsub.f32 %v1722, %v2409
      %v2498 = vsub.f32 %v1727, %v2410
      %v2499 = vsub.f32 %v1797, %v2411
      %v2500 = vsub.f32 %v1802, %v2412
      %v2501 = vsub.f32 %v1872, %v2413
      %v2502 = vsub.f32 %v1877, %v2414
      %v2503 = vsub.f32 %v1947, %v2415
      %v2504 = vsub.f32 %v1952, %v2416
      %v2505 = vsub.f32 %v2022, %v2417
      %v2506 = vsub.f32 %v2027, %v2418
      %v2507 = vsub.f32 %v2097, %v2419
      %v2508 = vsub.f32 %v2102, %v2420
      %v2509 = vadd.f32 %v2493, %v2501
      %v2510 = vadd.f32 %v2494, %v2502
      %v2511 = vadd.f32 %v2495, %v2503
      %v2512 = vadd.f32 %v2496, %v2504
      %v2513 = vadd.f32 %v2497, %v2505
      %v2514 = vadd.f32 %v2498, %v2506
      %v2515 = vadd.f32 %v2499, %v2507
      %v2516 = vadd.f32 %v2500, %v2508
      %v2517 = vadd.f32 %v2509, 0.0009
      %v2518 = vadd.f32 %v2510, 0.0009
      %v2519 = vadd.f32 %v2511, 0.0009
      %v2520 = vadd.f32 %v2512, 0.0009
      %v2521 = vadd.f32 %v2513, 0.0009
      %v2522 = vadd.f32 %v2514, 0.0009
      %v2523 = vadd.f32 %v2515, 0.0009
      %v2524 = vadd.f32 %v2516, 0.0009
      %v2525 = vmul.f32 %v2485, %v2517
      %v2526 = vmul.f32 %v2486, %v2518
      %v2527 = vmul.f32 %v2487, %v2519
      %v2528 = vmul.f32 %v2488, %v2520
      %v2529 = vmul.f32 %v2489, %v2521
      %v2530 = vmul.f32 %v2490, %v2522
      %v2531 = vmul.f32 %v2491, %v2523
      %v2532 = vmul.f32 %v2492, %v2524
      %v2533 = vrcp.pop %v2525
      %v2534 = vmul.f32 %v2469, %v2533
      %v2535 = vrcp.pop %v2526
      %v2536 = vmul.f32 %v2470, %v2535
      %v2537 = vrcp.pop %v2527
      %v2538 = vmul.f32 %v2471, %v2537
      %v2539 = vrcp.pop %v2528
      %v2540 = vmul.f32 %v2472, %v2539
      %v2541 = vrcp.pop %v2529
      %v2542 = vmul.f32 %v2473, %v2541
      %v2543 = vrcp.pop %v2530
      %v2544 = vmul.f32 %v2474, %v2543
      %v2545 = vrcp.pop %v2531
      %v2546 = vmul.f32 %v2475, %v2545
      %v2547 = vrcp.pop %v2532
      %v2548 = vmul.f32 %v2476, %v2547
      %v2549 = vsel %vm359, %v2534, 0.0
      %2550 = vadd.xlane.f32.xlu0 %v2549
      %v2551 = vpop.xlane.xlu0 %2550
      %v2552 = vsel %vm359, %v2536, 0.0
      %2553 = vadd.xlane.f32.xlu0 %v2552
      %v2554 = vpop.xlane.xlu0 %2553
      %v2555 = vsel %vm359, %v2538, 0.0
      %2556 = vadd.xlane.f32.xlu0 %v2555
      %v2557 = vpop.xlane.xlu0 %2556
      %v2558 = vsel %vm359, %v2540, 0.0
      %2559 = vadd.xlane.f32.xlu0 %v2558
      %v2560 = vpop.xlane.xlu0 %2559
      %v2561 = vsel %vm359, %v2542, 0.0
      %2562 = vadd.xlane.f32.xlu0 %v2561
      %v2563 = vpop.xlane.xlu0 %2562
      %v2564 = vsel %vm359, %v2544, 0.0
      %2565 = vadd.xlane.f32.xlu0 %v2564
      %v2566 = vpop.xlane.xlu0 %2565
      %v2567 = vsel %vm359, %v2546, 0.0
      %2568 = vadd.xlane.f32.xlu0 %v2567
      %v2569 = vpop.xlane.xlu0 %2568
      %v2570 = vsel %vm359, %v2548, 0.0
      %2571 = vadd.xlane.f32.xlu0 %v2570
      %v2572 = vpop.xlane.xlu0 %2571
      %v2573 = vadd.f32 %v2551, %v2554
      %v2574 = vadd.f32 %v2573, %v2557
      %v2575 = vadd.f32 %v2574, %v2560
      %v2576 = vadd.f32 %v2575, %v2563
      %v2577 = vadd.f32 %v2576, %v2566
      %v2578 = vadd.f32 %v2577, %v2569
      %v2579 = vadd.f32 %v2578, %v2572
      %v2580 = vrot.slane %v2579, 4
      %v2581 = vadd.f32 %v2579, %v2580
      %v2582 = vrot.slane %v2581, 2
      %v2583 = vadd.f32 %v2581, %v2582
      %v2584 = vrot.slane %v2583, 1
      %v2585 = vadd.f32 %v2583, %v2584
      %v2586 = vlaneseq
      %v2587 = vshrl.u32 %v2586, 7
      %v2588 = vlaneseq
      %v2589 = vand.u32 %v2588, 127
      %vm2590 = vcmp.eq.s32.totalorder %v2587, 0
      %vm2591 = vcmp.eq.s32.totalorder %v2589, 0
      %vm2592 = vmand %vm2590, %vm2591
      %v2593 = vsel %vm2592, 1.0, 0.0
      %v2594 = vmul.f32 %v2593, %v396
      %vm2595 = vcmp.eq.s32.totalorder %v2589, 1
      %vm2596 = vmand %vm2590, %vm2595
      %v2597 = vsel %vm2596, 1.0, 0.0
      %v2598 = vmul.f32 %v2597, %v2585
      %v2599 = vadd.f32 %v2594, %v2598
      %vm2600 = vcmp.eq.s32.totalorder %v2589, 2
      %vm2601 = vmand %vm2590, %vm2600
      %v2602 = vsel %vm2601, 1.0, 0.0
      %v2603 = vmul.f32 %v2602, %v489
      %v2604 = vadd.f32 %v2599, %v2603
      %2605 = vst [vmem:[%s320] sm:$0xff] %v2604
      %p2606 = scmp.lt.s32.totalorder %s20, 1
      %s2607 = scalar_select %p2606, %s20, 1
      %p2608 = scmp.lt.s32.totalorder %s21, 0
      %s2609 = scalar_select %p2608, %s21, 0
      %s2610 = sadd.s32 %s2609, %s2607
      %s2611 = smul.addr %s2610, 8
      %s2612 = scalar_lea.vmem %s5, %s2611
      // Predicated region
      $region41: #{ndsr_loss.1} parent=39 // pred_check
        %p2613 = pneg %p172
      $region42: #{ndsr_loss.1} parent=39 // pred_check_branch
        %2615 = sbr.rel (%p2613) target = $region44
      $region43: #{ndsr_loss.1} parent=39 // pred_region
        _
      $region44: #{ndsr_loss.1} parent=39 // pred_fallthru
        _
    $region40: #{ndsr_loss.1} parent=5 // pred_fallthru
      _
    %p2616 = scmp.le.s32.totalorder 2, %s11
    // Predicated region
    $region45: #{ndsr_loss.1} parent=5 // pred_check
      %p2617 = pneg %p2616
    $region46: #{ndsr_loss.1} parent=5 // pred_check_branch
      %2619 = sbr.rel (%p2617) target = $region48
    $region47: #{ndsr_loss.1} parent=5 // pred_region
      %s2620 = ssub.s32 %s11, 2
      // Predicated region
      $region49: #{ndsr_loss.1} parent=47 // pred_check
        %p2621 = pneg %p178
      $region50: #{ndsr_loss.1} parent=47 // pred_check_branch
        %2623 = sbr.rel (%p2621) target = $region52
      $region51: #{ndsr_loss.1} parent=47 // pred_region
        %p2624 = scmp.lt.s32.totalorder %s22, 1
        %s2625 = scalar_select %p2624, %s22, 1
        %p2626 = scmp.lt.s32.totalorder %s23, 0
        %s2627 = scalar_select %p2626, %s23, 0
        %s2628 = sadd.s32 %s2627, %s2625
        %s2629 = smul.addr %s2628, 8
        %s2630 = scalar_lea.vmem %s5, %s2629
      $region52: #{ndsr_loss.1} parent=47 // pred_fallthru
        _
    $region48: #{ndsr_loss.1} parent=5 // pred_fallthru
      _
  $region6: #{ndsr_loss.1} parent=0 // loop_footer
    %s15 = sadd.s32 1, %s11
  $region7: #{ndsr_loss.1} parent=0 // loop_footer_branch
    %10 = sbr.rel target = $region3
  $region8: #{ndsr_loss.1} parent=0 // loop_exit
    _

</llo_original>
